<compile_context>
chip_gen: v5e
topology: v5e:2x2
jax: 0.10.0
libtpu: 0.0.40
codegen_flags: <defaults>
</compile_context>

<pallas_src>
import jax
import jax.numpy as jnp
from jax.experimental import pallas as pl
from jax.experimental.pallas import tpu as pltpu

EPS = 1e-5
# Matmul operand dtype (accumulation is always f32).  Set to jnp.float32 for
# bit-exact f32 GEMMs; bf16 halves HBM/VMEM traffic and matches v6e/v7x MXU.
MXU_DTYPE = jnp.bfloat16


# -------------------- wrapper-side packing helpers (tiny, XLA) --------------------

def _fold_bn(bn):
    scale = bn["gamma"] / jnp.sqrt(bn["var"] + EPS)
    shift = bn["beta"] - bn["mean"] * scale
    return scale, shift


def _tile_lanes(v, w):
    # per-channel vector (C,) -> packed (1, W*C) row for the (h, w*C + c) layout
    return jnp.tile(v, w).reshape(1, -1).astype(jnp.float32)


def _blockdiag(m, w):
    # m: (Cin, Cout) tap -> (W*Cin, W*Cout) block-diagonal GEMM operand
    return jnp.kron(jnp.eye(w, dtype=jnp.float32), m.astype(jnp.float32))


def _banded(taps, w, dil):
    # taps: (Cin, Cout, K) horizontal-conv taps -> (W*Cin, W*Cout) banded matrix.
    # Off-image taps are truncated by the shifted eye, which realizes the conv's
    # zero padding with no explicit pad buffer.
    cin, cout, k = taps.shape
    half = (k - 1) // 2
    out = jnp.zeros((w * cin, w * cout), jnp.float32)
    for kw in range(k):
        s = (kw - half) * dil
        out = out + jnp.kron(jnp.eye(w, w, k=-s, dtype=jnp.float32),
                             taps[:, :, kw].astype(jnp.float32))
    return out


def _pack_acblock(p, w):
    sA, hA = _fold_bn(p["bn2"])          # BN feeding the (5,1) branch
    sB, hB = _fold_bn(p["bn3"])          # BN feeding the (1,3) branch
    dh = p["dil2"][0]                    # vertical dilation of the (5,1) conv
    dw = p["dil3"][1]                    # horizontal dilation of the (1,3) conv
    w2, w3 = p["w2"], p["w3"]            # OIHW weights
    # (5,1) conv: one block-diagonal matrix per vertical tap
    WA = jnp.stack([_blockdiag(w2[:, :, kh, 0].T, w) for kh in range(5)], axis=0)
    # (1,3) conv: whole conv (all 3 taps + zero pad) folds into ONE banded GEMM
    WB = _banded(jnp.transpose(w3[:, :, 0, :], (1, 0, 2)), w, dw)
    bias = _tile_lanes(p["b2"] + p["b3"], w)
    return dict(sA=_tile_lanes(sA, w), hA=_tile_lanes(hA, w),
                sB=_tile_lanes(sB, w), hB=_tile_lanes(hB, w),
                WA=WA.astype(MXU_DTYPE), WB=WB.astype(MXU_DTYPE),
                bias=bias, dh=dh)


def _pack_final(params, w):
    sF, hF = _fold_bn(params["final_bn"])
    df = 2 ** (params["dilation"] + 1)   # pad == dilation for the final 3x3 conv
    wf = params["final_w"]               # (Cg, Cg, 3, 3), no bias
    # per vertical tap kh: the 3 horizontal taps fold into one banded GEMM
    WF = jnp.stack([_banded(jnp.transpose(wf[:, :, kh, :], (1, 0, 2)), w, df)
                    for kh in range(3)], axis=0)
    # conv_skip: fold the BN affine directly into the 1x1 weights / bias
    ss, hs = _fold_bn(params["skip_bn"])
    wsk = params["skip_w"][:, :, 0, 0] * ss[:, None]      # (Cg, Cin)
    bsk = params["skip_b"] * ss + hs                      # (Cg,)
    return dict(sF=_tile_lanes(sF, w), hF=_tile_lanes(hF, w),
                WF=WF.astype(MXU_DTYPE),
                Wsk=_blockdiag(wsk.T, w).astype(MXU_DTYPE),
                bsk=_tile_lanes(bsk, w), df=df)


def _const_spec(a):
    nd = a.ndim
    return pl.BlockSpec(a.shape, lambda n, _nd=nd: (0,) * _nd)


# ------------------------------- fused forward -------------------------------

def dense_layer_forward(x_nchw, params):
    N, Cin, H, W = x_nchw.shape
    Cg = params["final_w"].shape[0]
    Lin, Lg = W * Cin, W * Cg

    ac1 = _pack_acblock(params["ac1"], W)
    ac2 = _pack_acblock(params["ac2"], W)
    fin = _pack_final(params, W)
    dh1, dh2, df = ac1["dh"], ac2["dh"], fin["df"]

    # NCHW -> lane-dense packed layout (N, H, W*C)
    xp = jnp.transpose(x_nchw, (0, 2, 3, 1)).reshape(N, H, Lin)

    def kernel(x_ref,
               sA1, hA1, sB1, hB1, WA1, WB1, bb1,
               sA2, hA2, sB2, hB2, WA2, WB2, bb2,
               sF, hF, WF, Wsk, bsk,
               o_ref):
        x = x_ref[...]                                          # (H, W*Cin) f32

        def acblock(a_in, sA, hA, sB, hB, WA, WB, bb, dh):
            # fused eval-BN + ReLU (f32 VPU work) feeding both conv branches
            aA = jnp.maximum(a_in * sA[...] + hA[...], 0.0).astype(MXU_DTYPE)
            aB = jnp.maximum(a_in * sB[...] + hB[...], 0.0).astype(MXU_DTYPE)
            # (1,3) dilated conv: single banded lane-dense GEMM (pad folded in)
            acc = bb[...] + jnp.dot(aB, WB[...],
                                    preferred_element_type=jnp.float32)
            # (5,1) dilated conv: zero-pad rows once, 5 block-diagonal GEMMs
            zp = jnp.zeros((2 * dh, aA.shape[1]), MXU_DTYPE)
            ap = jnp.concatenate([zp, aA, zp], axis=0)          # (H + 4*dh, L)
            for kh in range(5):
                acc = acc + jnp.dot(ap[kh * dh:kh * dh + H, :], WA[kh],
                                    preferred_element_type=jnp.float32)
            return acc                                          # (H, W*Cg) f32

        h1 = acblock(x, sA1, hA1, sB1, hB1, WA1, WB1, bb1, dh1)
        h2 = acblock(h1, sA2, hA2, sB2, hB2, WA2, WB2, bb2, dh2)

        # conv_skip (1x1 conv + BN, folded) fused into the final accumulation
        acc = bsk[...] + jnp.dot(x.astype(MXU_DTYPE), Wsk[...],
                                 preferred_element_type=jnp.float32)
        # final BN + ReLU + 3x3 dilated conv (no bias)
        aF = jnp.maximum(h2 * sF[...] + hF[...], 0.0).astype(MXU_DTYPE)
        zf = jnp.zeros((df, Lg), MXU_DTYPE)
        afp = jnp.concatenate([zf, aF, zf], axis=0)             # (H + 2*df, Lg)
        for kh in range(3):
            acc = acc + jnp.dot(afp[kh * df:kh * df + H, :], WF[kh],
                                preferred_element_type=jnp.float32)
        # _pad() is the identity (stride-1 "same" convs); drop_rate == 0 -> no dropout.
        o_ref[...] = acc.astype(o_ref.dtype)

    p_args = [ac1["sA"], ac1["hA"], ac1["sB"], ac1["hB"], ac1["WA"], ac1["WB"], ac1["bias"],
              ac2["sA"], ac2["hA"], ac2["sB"], ac2["hB"], ac2["WA"], ac2["WB"], ac2["bias"],
              fin["sF"], fin["hF"], fin["WF"], fin["Wsk"], fin["bsk"]]

    in_specs = [pl.BlockSpec((None, H, Lin), lambda n: (n, 0, 0))]
    in_specs += [_const_spec(a) for a in p_args]

    out = pl.pallas_call(
        kernel,
        out_shape=jax.ShapeDtypeStruct((N, H, Lg), jnp.float32),
        grid=(N,),
        in_specs=in_specs,
        out_specs=pl.BlockSpec((None, H, Lg), lambda n: (n, 0, 0)),
        compiler_params=pltpu.CompilerParams(
            dimension_semantics=("parallel",)),   # batch axis -> both TCs on v7x
    )(xp, *p_args)

    return jnp.transpose(out.reshape(N, H, W, Cg), (0, 3, 1, 2))   # NHWC -> NCHW


# --------------------------- deterministic init ---------------------------

def _init_bn(key, c):
    k1, k2, k3, k4 = jax.random.split(key, 4)
    return dict(gamma=jax.random.uniform(k1, (c,), jnp.float32, 0.5, 1.5),
                beta=0.1 * jax.random.normal(k2, (c,), jnp.float32),
                mean=0.1 * jax.random.normal(k3, (c,), jnp.float32),
                var=jax.random.uniform(k4, (c,), jnp.float32, 0.5, 1.5))


def _init_conv(key, cout, cin, kh, kw, bias=True):
    k1, k2 = jax.random.split(key)
    w = jax.random.normal(k1, (cout, cin, kh, kw), jnp.float32) / jnp.sqrt(cin * kh * kw)
    b = 0.1 * jax.random.normal(k2, (cout,), jnp.float32) if bias else None
    return w, b


def init_acblock(key, cin, cout, d):
    k1, k2, k3, k4 = jax.random.split(key, 4)
    w2, b2 = _init_conv(k2, cout, cin, 5, 1)
    w3, b3 = _init_conv(k4, cout, cin, 1, 3)
    return dict(bn2=_init_bn(k1, cin), w2=w2, b2=b2,
                pad2=(2 ** (d + 1), 0), dil2=(2 ** d, 1),
                bn3=_init_bn(k3, cin), w3=w3, b3=b3,
                pad3=(0, 2 ** d), dil3=(1, 2 ** d))


def init_dense_layer(key, num_input_features, growth_rate, dilation=1):
    keys = jax.random.split(key, 6)
    w_final, _ = _init_conv(keys[2], growth_rate, growth_rate, 3, 3, bias=False)
    w_skip, b_skip = _init_conv(keys[4], growth_rate, num_input_features, 1, 1)
    return dict(
        ac1=init_acblock(keys[0], num_input_features, growth_rate, dilation),
        ac2=init_acblock(keys[1], growth_rate, growth_rate, dilation + 1),
        final_bn=_init_bn(keys[3], growth_rate),
        final_w=w_final,
        skip_w=w_skip, skip_b=b_skip, skip_bn=_init_bn(keys[5], growth_rate),
        dilation=dilation)


# ----------------------------------- main -----------------------------------

if __name__ == "__main__":
    key = jax.random.PRNGKey(0)
    kx, kp = jax.random.split(key)

    N, C, H, W = 2, 4, 16, 16          # num_input_features = 4
    growth_rate = 8
    dilation = 1

    x = jax.random.normal(kx, (N, C, H, W), jnp.float32)   # NCHW, like PyTorch
    params = init_dense_layer(kp, C, growth_rate, dilation=dilation)

    y = dense_layer_forward(x, params)
    jax.block_until_ready(y)

    assert y.shape == (N, growth_rate, H, W), y.shape
    assert jnp.all(jnp.isfinite(y))
    print("KERNEL_OK")
</pallas_src>

<mosaic_0001>
module attributes {stable_mosaic.version = 11 : i64} {
  func.func @kernel(%arg0: i32, %arg1: memref<1x16x64xf32, #tpu.memory_space<vmem>>, %arg2: memref<1x64xf32, #tpu.memory_space<vmem>>, %arg3: memref<1x64xf32, #tpu.memory_space<vmem>>, %arg4: memref<1x64xf32, #tpu.memory_space<vmem>>, %arg5: memref<1x64xf32, #tpu.memory_space<vmem>>, %arg6: memref<5x64x128xbf16, #tpu.memory_space<vmem>>, %arg7: memref<64x128xbf16, #tpu.memory_space<vmem>>, %arg8: memref<1x128xf32, #tpu.memory_space<vmem>>, %arg9: memref<1x128xf32, #tpu.memory_space<vmem>>, %arg10: memref<1x128xf32, #tpu.memory_space<vmem>>, %arg11: memref<1x128xf32, #tpu.memory_space<vmem>>, %arg12: memref<1x128xf32, #tpu.memory_space<vmem>>, %arg13: memref<5x128x128xbf16, #tpu.memory_space<vmem>>, %arg14: memref<128x128xbf16, #tpu.memory_space<vmem>>, %arg15: memref<1x128xf32, #tpu.memory_space<vmem>>, %arg16: memref<1x128xf32, #tpu.memory_space<vmem>>, %arg17: memref<1x128xf32, #tpu.memory_space<vmem>>, %arg18: memref<3x128x128xbf16, #tpu.memory_space<vmem>>, %arg19: memref<64x128xbf16, #tpu.memory_space<vmem>>, %arg20: memref<1x128xf32, #tpu.memory_space<vmem>>, %arg21: memref<1x16x128xf32, #tpu.memory_space<vmem>>) attributes {dimension_semantics = [#tpu.dimension_semantics<parallel>], iteration_bounds = array<i64: 2>, scalar_prefetch = 0 : i64, scratch_operands = 0 : i64, tpu.core_type = #tpu.core_type<tc>, window_params = [{transform_indices = @transform_0, window_bounds = array<i64: 1, 16, 64>}, {pipeline_mode = #tpu.pipeline_mode<synchronous>, transform_indices = @transform_1, window_bounds = array<i64: 1, 64>}, {pipeline_mode = #tpu.pipeline_mode<synchronous>, transform_indices = @transform_2, window_bounds = array<i64: 1, 64>}, {pipeline_mode = #tpu.pipeline_mode<synchronous>, transform_indices = @transform_3, window_bounds = array<i64: 1, 64>}, {pipeline_mode = #tpu.pipeline_mode<synchronous>, transform_indices = @transform_4, window_bounds = array<i64: 1, 64>}, {pipeline_mode = #tpu.pipeline_mode<synchronous>, transform_indices = @transform_5, window_bounds = array<i64: 5, 64, 128>}, {pipeline_mode = #tpu.pipeline_mode<synchronous>, transform_indices = @transform_6, window_bounds = array<i64: 64, 128>}, {pipeline_mode = #tpu.pipeline_mode<synchronous>, transform_indices = @transform_7, window_bounds = array<i64: 1, 128>}, {pipeline_mode = #tpu.pipeline_mode<synchronous>, transform_indices = @transform_8, window_bounds = array<i64: 1, 128>}, {pipeline_mode = #tpu.pipeline_mode<synchronous>, transform_indices = @transform_9, window_bounds = array<i64: 1, 128>}, {pipeline_mode = #tpu.pipeline_mode<synchronous>, transform_indices = @transform_10, window_bounds = array<i64: 1, 128>}, {pipeline_mode = #tpu.pipeline_mode<synchronous>, transform_indices = @transform_11, window_bounds = array<i64: 1, 128>}, {pipeline_mode = #tpu.pipeline_mode<synchronous>, transform_indices = @transform_12, window_bounds = array<i64: 5, 128, 128>}, {pipeline_mode = #tpu.pipeline_mode<synchronous>, transform_indices = @transform_13, window_bounds = array<i64: 128, 128>}, {pipeline_mode = #tpu.pipeline_mode<synchronous>, transform_indices = @transform_14, window_bounds = array<i64: 1, 128>}, {pipeline_mode = #tpu.pipeline_mode<synchronous>, transform_indices = @transform_15, window_bounds = array<i64: 1, 128>}, {pipeline_mode = #tpu.pipeline_mode<synchronous>, transform_indices = @transform_16, window_bounds = array<i64: 1, 128>}, {pipeline_mode = #tpu.pipeline_mode<synchronous>, transform_indices = @transform_17, window_bounds = array<i64: 3, 128, 128>}, {pipeline_mode = #tpu.pipeline_mode<synchronous>, transform_indices = @transform_18, window_bounds = array<i64: 64, 128>}, {pipeline_mode = #tpu.pipeline_mode<synchronous>, transform_indices = @transform_19, window_bounds = array<i64: 1, 128>}, {transform_indices = @transform_20, window_bounds = array<i64: 1, 16, 128>}]} {
    %c0 = arith.constant 0 : index
    %c0_0 = arith.constant 0 : index
    %c0_1 = arith.constant 0 : index
    %0 = vector.load %arg1[%c0, %c0_0, %c0_1] : memref<1x16x64xf32, #tpu.memory_space<vmem>>, vector<1x16x64xf32>
    %1 = vector.shape_cast %0 : vector<1x16x64xf32> to vector<16x64xf32>
    %c0_2 = arith.constant 0 : index
    %c0_3 = arith.constant 0 : index
    %2 = vector.load %arg2[%c0_2, %c0_3] : memref<1x64xf32, #tpu.memory_space<vmem>>, vector<1x64xf32>
    %3 = vector.broadcast %2 : vector<1x64xf32> to vector<16x64xf32>
    %4 = arith.mulf %1, %3 : vector<16x64xf32>
    %c0_4 = arith.constant 0 : index
    %c0_5 = arith.constant 0 : index
    %5 = vector.load %arg3[%c0_4, %c0_5] : memref<1x64xf32, #tpu.memory_space<vmem>>, vector<1x64xf32>
    %6 = vector.broadcast %5 : vector<1x64xf32> to vector<16x64xf32>
    %7 = arith.addf %4, %6 : vector<16x64xf32>
    %cst = arith.constant 0.000000e+00 : f32
    %8 = vector.broadcast %cst : f32 to vector<16x64xf32>
    %9 = arith.maximumf %7, %8 : vector<16x64xf32>
    %10 = arith.truncf %9 : vector<16x64xf32> to vector<16x64xbf16>
    %c0_6 = arith.constant 0 : index
    %c0_7 = arith.constant 0 : index
    %11 = vector.load %arg4[%c0_6, %c0_7] : memref<1x64xf32, #tpu.memory_space<vmem>>, vector<1x64xf32>
    %12 = vector.broadcast %11 : vector<1x64xf32> to vector<16x64xf32>
    %13 = arith.mulf %1, %12 : vector<16x64xf32>
    %c0_8 = arith.constant 0 : index
    %c0_9 = arith.constant 0 : index
    %14 = vector.load %arg5[%c0_8, %c0_9] : memref<1x64xf32, #tpu.memory_space<vmem>>, vector<1x64xf32>
    %15 = vector.broadcast %14 : vector<1x64xf32> to vector<16x64xf32>
    %16 = arith.addf %13, %15 : vector<16x64xf32>
    %cst_10 = arith.constant 0.000000e+00 : f32
    %17 = vector.broadcast %cst_10 : f32 to vector<16x64xf32>
    %18 = arith.maximumf %16, %17 : vector<16x64xf32>
    %19 = arith.truncf %18 : vector<16x64xf32> to vector<16x64xbf16>
    %c0_11 = arith.constant 0 : index
    %c0_12 = arith.constant 0 : index
    %20 = vector.load %arg8[%c0_11, %c0_12] : memref<1x128xf32, #tpu.memory_space<vmem>>, vector<1x128xf32>
    %c0_13 = arith.constant 0 : index
    %c0_14 = arith.constant 0 : index
    %21 = vector.load %arg7[%c0_13, %c0_14] : memref<64x128xbf16, #tpu.memory_space<vmem>>, vector<64x128xbf16>
    %cst_15 = arith.constant dense<0.000000e+00> : vector<16x128xf32>
    %22 = tpu.matmul %19, %21, %cst_15 {dimension_numbers = #tpu.dot_dimension_numbers<[1], [0], [0], [1], [0, 0, 1, 1], [], []>} : vector<16x64xbf16>, vector<64x128xbf16>, vector<16x128xf32> -> vector<16x128xf32>
    %23 = vector.broadcast %20 : vector<1x128xf32> to vector<16x128xf32>
    %24 = arith.addf %23, %22 : vector<16x128xf32>
    %cst_16 = arith.constant 0.000000e+00 : bf16
    %25 = vector.broadcast %cst_16 : bf16 to vector<4x64xbf16>
    %26 = tpu.concatenate %25, %10, %25 in 0 : vector<4x64xbf16>, vector<16x64xbf16>, vector<4x64xbf16> -> vector<24x64xbf16>
    %27 = vector.extract_strided_slice %26 {offsets = [0, 0], sizes = [16, 64], strides = [1, 1]} : vector<24x64xbf16> to vector<16x64xbf16>
    %c0_17 = arith.constant 0 : index
    %c0_18 = arith.constant 0 : index
    %c0_19 = arith.constant 0 : index
    %28 = vector.load %arg6[%c0_17, %c0_18, %c0_19] : memref<5x64x128xbf16, #tpu.memory_space<vmem>>, vector<1x64x128xbf16>
    %29 = vector.shape_cast %28 : vector<1x64x128xbf16> to vector<64x128xbf16>
    %cst_20 = arith.constant dense<0.000000e+00> : vector<16x128xf32>
    %30 = tpu.matmul %27, %29, %cst_20 {dimension_numbers = #tpu.dot_dimension_numbers<[1], [0], [0], [1], [0, 0, 1, 1], [], []>} : vector<16x64xbf16>, vector<64x128xbf16>, vector<16x128xf32> -> vector<16x128xf32>
    %31 = arith.addf %24, %30 : vector<16x128xf32>
    %32 = vector.extract_strided_slice %26 {offsets = [2, 0], sizes = [16, 64], strides = [1, 1]} : vector<24x64xbf16> to vector<16x64xbf16>
    %c1 = arith.constant 1 : index
    %c0_21 = arith.constant 0 : index
    %c0_22 = arith.constant 0 : index
    %33 = vector.load %arg6[%c1, %c0_21, %c0_22] : memref<5x64x128xbf16, #tpu.memory_space<vmem>>, vector<1x64x128xbf16>
    %34 = vector.shape_cast %33 : vector<1x64x128xbf16> to vector<64x128xbf16>
    %cst_23 = arith.constant dense<0.000000e+00> : vector<16x128xf32>
    %35 = tpu.matmul %32, %34, %cst_23 {dimension_numbers = #tpu.dot_dimension_numbers<[1], [0], [0], [1], [0, 0, 1, 1], [], []>} : vector<16x64xbf16>, vector<64x128xbf16>, vector<16x128xf32> -> vector<16x128xf32>
    %36 = arith.addf %31, %35 : vector<16x128xf32>
    %37 = vector.extract_strided_slice %26 {offsets = [4, 0], sizes = [16, 64], strides = [1, 1]} : vector<24x64xbf16> to vector<16x64xbf16>
    %c2 = arith.constant 2 : index
    %c0_24 = arith.constant 0 : index
    %c0_25 = arith.constant 0 : index
    %38 = vector.load %arg6[%c2, %c0_24, %c0_25] : memref<5x64x128xbf16, #tpu.memory_space<vmem>>, vector<1x64x128xbf16>
    %39 = vector.shape_cast %38 : vector<1x64x128xbf16> to vector<64x128xbf16>
    %cst_26 = arith.constant dense<0.000000e+00> : vector<16x128xf32>
    %40 = tpu.matmul %37, %39, %cst_26 {dimension_numbers = #tpu.dot_dimension_numbers<[1], [0], [0], [1], [0, 0, 1, 1], [], []>} : vector<16x64xbf16>, vector<64x128xbf16>, vector<16x128xf32> -> vector<16x128xf32>
    %41 = arith.addf %36, %40 : vector<16x128xf32>
    %42 = vector.extract_strided_slice %26 {offsets = [6, 0], sizes = [16, 64], strides = [1, 1]} : vector<24x64xbf16> to vector<16x64xbf16>
    %c3 = arith.constant 3 : index
    %c0_27 = arith.constant 0 : index
    %c0_28 = arith.constant 0 : index
    %43 = vector.load %arg6[%c3, %c0_27, %c0_28] : memref<5x64x128xbf16, #tpu.memory_space<vmem>>, vector<1x64x128xbf16>
    %44 = vector.shape_cast %43 : vector<1x64x128xbf16> to vector<64x128xbf16>
    %cst_29 = arith.constant dense<0.000000e+00> : vector<16x128xf32>
    %45 = tpu.matmul %42, %44, %cst_29 {dimension_numbers = #tpu.dot_dimension_numbers<[1], [0], [0], [1], [0, 0, 1, 1], [], []>} : vector<16x64xbf16>, vector<64x128xbf16>, vector<16x128xf32> -> vector<16x128xf32>
    %46 = arith.addf %41, %45 : vector<16x128xf32>
    %47 = vector.extract_strided_slice %26 {offsets = [8, 0], sizes = [16, 64], strides = [1, 1]} : vector<24x64xbf16> to vector<16x64xbf16>
    %c4 = arith.constant 4 : index
    %c0_30 = arith.constant 0 : index
    %c0_31 = arith.constant 0 : index
    %48 = vector.load %arg6[%c4, %c0_30, %c0_31] : memref<5x64x128xbf16, #tpu.memory_space<vmem>>, vector<1x64x128xbf16>
    %49 = vector.shape_cast %48 : vector<1x64x128xbf16> to vector<64x128xbf16>
    %cst_32 = arith.constant dense<0.000000e+00> : vector<16x128xf32>
    %50 = tpu.matmul %47, %49, %cst_32 {dimension_numbers = #tpu.dot_dimension_numbers<[1], [0], [0], [1], [0, 0, 1, 1], [], []>} : vector<16x64xbf16>, vector<64x128xbf16>, vector<16x128xf32> -> vector<16x128xf32>
    %51 = arith.addf %46, %50 : vector<16x128xf32>
    %c0_33 = arith.constant 0 : index
    %c0_34 = arith.constant 0 : index
    %52 = vector.load %arg9[%c0_33, %c0_34] : memref<1x128xf32, #tpu.memory_space<vmem>>, vector<1x128xf32>
    %53 = vector.broadcast %52 : vector<1x128xf32> to vector<16x128xf32>
    %54 = arith.mulf %51, %53 : vector<16x128xf32>
    %c0_35 = arith.constant 0 : index
    %c0_36 = arith.constant 0 : index
    %55 = vector.load %arg10[%c0_35, %c0_36] : memref<1x128xf32, #tpu.memory_space<vmem>>, vector<1x128xf32>
    %56 = vector.broadcast %55 : vector<1x128xf32> to vector<16x128xf32>
    %57 = arith.addf %54, %56 : vector<16x128xf32>
    %cst_37 = arith.constant 0.000000e+00 : f32
    %58 = vector.broadcast %cst_37 : f32 to vector<16x128xf32>
    %59 = arith.maximumf %57, %58 : vector<16x128xf32>
    %60 = arith.truncf %59 : vector<16x128xf32> to vector<16x128xbf16>
    %c0_38 = arith.constant 0 : index
    %c0_39 = arith.constant 0 : index
    %61 = vector.load %arg11[%c0_38, %c0_39] : memref<1x128xf32, #tpu.memory_space<vmem>>, vector<1x128xf32>
    %62 = vector.broadcast %61 : vector<1x128xf32> to vector<16x128xf32>
    %63 = arith.mulf %51, %62 : vector<16x128xf32>
    %c0_40 = arith.constant 0 : index
    %c0_41 = arith.constant 0 : index
    %64 = vector.load %arg12[%c0_40, %c0_41] : memref<1x128xf32, #tpu.memory_space<vmem>>, vector<1x128xf32>
    %65 = vector.broadcast %64 : vector<1x128xf32> to vector<16x128xf32>
    %66 = arith.addf %63, %65 : vector<16x128xf32>
    %cst_42 = arith.constant 0.000000e+00 : f32
    %67 = vector.broadcast %cst_42 : f32 to vector<16x128xf32>
    %68 = arith.maximumf %66, %67 : vector<16x128xf32>
    %69 = arith.truncf %68 : vector<16x128xf32> to vector<16x128xbf16>
    %c0_43 = arith.constant 0 : index
    %c0_44 = arith.constant 0 : index
    %70 = vector.load %arg15[%c0_43, %c0_44] : memref<1x128xf32, #tpu.memory_space<vmem>>, vector<1x128xf32>
    %c0_45 = arith.constant 0 : index
    %c0_46 = arith.constant 0 : index
    %71 = vector.load %arg14[%c0_45, %c0_46] : memref<128x128xbf16, #tpu.memory_space<vmem>>, vector<128x128xbf16>
    %cst_47 = arith.constant dense<0.000000e+00> : vector<16x128xf32>
    %72 = tpu.matmul %69, %71, %cst_47 {dimension_numbers = #tpu.dot_dimension_numbers<[1], [0], [0], [1], [0, 0, 1, 1], [], []>} : vector<16x128xbf16>, vector<128x128xbf16>, vector<16x128xf32> -> vector<16x128xf32>
    %73 = vector.broadcast %70 : vector<1x128xf32> to vector<16x128xf32>
    %74 = arith.addf %73, %72 : vector<16x128xf32>
    %cst_48 = arith.constant 0.000000e+00 : bf16
    %75 = vector.broadcast %cst_48 : bf16 to vector<8x128xbf16>
    %76 = tpu.concatenate %75, %60, %75 in 0 : vector<8x128xbf16>, vector<16x128xbf16>, vector<8x128xbf16> -> vector<32x128xbf16>
    %77 = vector.extract_strided_slice %76 {offsets = [0, 0], sizes = [16, 128], strides = [1, 1]} : vector<32x128xbf16> to vector<16x128xbf16>
    %c0_49 = arith.constant 0 : index
    %c0_50 = arith.constant 0 : index
    %c0_51 = arith.constant 0 : index
    %78 = vector.load %arg13[%c0_49, %c0_50, %c0_51] : memref<5x128x128xbf16, #tpu.memory_space<vmem>>, vector<1x128x128xbf16>
    %79 = vector.shape_cast %78 : vector<1x128x128xbf16> to vector<128x128xbf16>
    %cst_52 = arith.constant dense<0.000000e+00> : vector<16x128xf32>
    %80 = tpu.matmul %77, %79, %cst_52 {dimension_numbers = #tpu.dot_dimension_numbers<[1], [0], [0], [1], [0, 0, 1, 1], [], []>} : vector<16x128xbf16>, vector<128x128xbf16>, vector<16x128xf32> -> vector<16x128xf32>
    %81 = arith.addf %74, %80 : vector<16x128xf32>
    %82 = vector.extract_strided_slice %76 {offsets = [4, 0], sizes = [16, 128], strides = [1, 1]} : vector<32x128xbf16> to vector<16x128xbf16>
    %c1_53 = arith.constant 1 : index
    %c0_54 = arith.constant 0 : index
    %c0_55 = arith.constant 0 : index
    %83 = vector.load %arg13[%c1_53, %c0_54, %c0_55] : memref<5x128x128xbf16, #tpu.memory_space<vmem>>, vector<1x128x128xbf16>
    %84 = vector.shape_cast %83 : vector<1x128x128xbf16> to vector<128x128xbf16>
    %cst_56 = arith.constant dense<0.000000e+00> : vector<16x128xf32>
    %85 = tpu.matmul %82, %84, %cst_56 {dimension_numbers = #tpu.dot_dimension_numbers<[1], [0], [0], [1], [0, 0, 1, 1], [], []>} : vector<16x128xbf16>, vector<128x128xbf16>, vector<16x128xf32> -> vector<16x128xf32>
    %86 = arith.addf %81, %85 : vector<16x128xf32>
    %87 = vector.extract_strided_slice %76 {offsets = [8, 0], sizes = [16, 128], strides = [1, 1]} : vector<32x128xbf16> to vector<16x128xbf16>
    %c2_57 = arith.constant 2 : index
    %c0_58 = arith.constant 0 : index
    %c0_59 = arith.constant 0 : index
    %88 = vector.load %arg13[%c2_57, %c0_58, %c0_59] : memref<5x128x128xbf16, #tpu.memory_space<vmem>>, vector<1x128x128xbf16>
    %89 = vector.shape_cast %88 : vector<1x128x128xbf16> to vector<128x128xbf16>
    %cst_60 = arith.constant dense<0.000000e+00> : vector<16x128xf32>
    %90 = tpu.matmul %87, %89, %cst_60 {dimension_numbers = #tpu.dot_dimension_numbers<[1], [0], [0], [1], [0, 0, 1, 1], [], []>} : vector<16x128xbf16>, vector<128x128xbf16>, vector<16x128xf32> -> vector<16x128xf32>
    %91 = arith.addf %86, %90 : vector<16x128xf32>
    %92 = vector.extract_strided_slice %76 {offsets = [12, 0], sizes = [16, 128], strides = [1, 1]} : vector<32x128xbf16> to vector<16x128xbf16>
    %c3_61 = arith.constant 3 : index
    %c0_62 = arith.constant 0 : index
    %c0_63 = arith.constant 0 : index
    %93 = vector.load %arg13[%c3_61, %c0_62, %c0_63] : memref<5x128x128xbf16, #tpu.memory_space<vmem>>, vector<1x128x128xbf16>
    %94 = vector.shape_cast %93 : vector<1x128x128xbf16> to vector<128x128xbf16>
    %cst_64 = arith.constant dense<0.000000e+00> : vector<16x128xf32>
    %95 = tpu.matmul %92, %94, %cst_64 {dimension_numbers = #tpu.dot_dimension_numbers<[1], [0], [0], [1], [0, 0, 1, 1], [], []>} : vector<16x128xbf16>, vector<128x128xbf16>, vector<16x128xf32> -> vector<16x128xf32>
    %96 = arith.addf %91, %95 : vector<16x128xf32>
    %97 = vector.extract_strided_slice %76 {offsets = [16, 0], sizes = [16, 128], strides = [1, 1]} : vector<32x128xbf16> to vector<16x128xbf16>
    %c4_65 = arith.constant 4 : index
    %c0_66 = arith.constant 0 : index
    %c0_67 = arith.constant 0 : index
    %98 = vector.load %arg13[%c4_65, %c0_66, %c0_67] : memref<5x128x128xbf16, #tpu.memory_space<vmem>>, vector<1x128x128xbf16>
    %99 = vector.shape_cast %98 : vector<1x128x128xbf16> to vector<128x128xbf16>
    %cst_68 = arith.constant dense<0.000000e+00> : vector<16x128xf32>
    %100 = tpu.matmul %97, %99, %cst_68 {dimension_numbers = #tpu.dot_dimension_numbers<[1], [0], [0], [1], [0, 0, 1, 1], [], []>} : vector<16x128xbf16>, vector<128x128xbf16>, vector<16x128xf32> -> vector<16x128xf32>
    %101 = arith.addf %96, %100 : vector<16x128xf32>
    %c0_69 = arith.constant 0 : index
    %c0_70 = arith.constant 0 : index
    %102 = vector.load %arg20[%c0_69, %c0_70] : memref<1x128xf32, #tpu.memory_space<vmem>>, vector<1x128xf32>
    %103 = arith.truncf %1 : vector<16x64xf32> to vector<16x64xbf16>
    %c0_71 = arith.constant 0 : index
    %c0_72 = arith.constant 0 : index
    %104 = vector.load %arg19[%c0_71, %c0_72] : memref<64x128xbf16, #tpu.memory_space<vmem>>, vector<64x128xbf16>
    %cst_73 = arith.constant dense<0.000000e+00> : vector<16x128xf32>
    %105 = tpu.matmul %103, %104, %cst_73 {dimension_numbers = #tpu.dot_dimension_numbers<[1], [0], [0], [1], [0, 0, 1, 1], [], []>} : vector<16x64xbf16>, vector<64x128xbf16>, vector<16x128xf32> -> vector<16x128xf32>
    %106 = vector.broadcast %102 : vector<1x128xf32> to vector<16x128xf32>
    %107 = arith.addf %106, %105 : vector<16x128xf32>
    %c0_74 = arith.constant 0 : index
    %c0_75 = arith.constant 0 : index
    %108 = vector.load %arg16[%c0_74, %c0_75] : memref<1x128xf32, #tpu.memory_space<vmem>>, vector<1x128xf32>
    %109 = vector.broadcast %108 : vector<1x128xf32> to vector<16x128xf32>
    %110 = arith.mulf %101, %109 : vector<16x128xf32>
    %c0_76 = arith.constant 0 : index
    %c0_77 = arith.constant 0 : index
    %111 = vector.load %arg17[%c0_76, %c0_77] : memref<1x128xf32, #tpu.memory_space<vmem>>, vector<1x128xf32>
    %112 = vector.broadcast %111 : vector<1x128xf32> to vector<16x128xf32>
    %113 = arith.addf %110, %112 : vector<16x128xf32>
    %cst_78 = arith.constant 0.000000e+00 : f32
    %114 = vector.broadcast %cst_78 : f32 to vector<16x128xf32>
    %115 = arith.maximumf %113, %114 : vector<16x128xf32>
    %116 = arith.truncf %115 : vector<16x128xf32> to vector<16x128xbf16>
    %cst_79 = arith.constant 0.000000e+00 : bf16
    %117 = vector.broadcast %cst_79 : bf16 to vector<4x128xbf16>
    %118 = tpu.concatenate %117, %116, %117 in 0 : vector<4x128xbf16>, vector<16x128xbf16>, vector<4x128xbf16> -> vector<24x128xbf16>
    %119 = vector.extract_strided_slice %118 {offsets = [0, 0], sizes = [16, 128], strides = [1, 1]} : vector<24x128xbf16> to vector<16x128xbf16>
    %c0_80 = arith.constant 0 : index
    %c0_81 = arith.constant 0 : index
    %c0_82 = arith.constant 0 : index
    %120 = vector.load %arg18[%c0_80, %c0_81, %c0_82] : memref<3x128x128xbf16, #tpu.memory_space<vmem>>, vector<1x128x128xbf16>
    %121 = vector.shape_cast %120 : vector<1x128x128xbf16> to vector<128x128xbf16>
    %cst_83 = arith.constant dense<0.000000e+00> : vector<16x128xf32>
    %122 = tpu.matmul %119, %121, %cst_83 {dimension_numbers = #tpu.dot_dimension_numbers<[1], [0], [0], [1], [0, 0, 1, 1], [], []>} : vector<16x128xbf16>, vector<128x128xbf16>, vector<16x128xf32> -> vector<16x128xf32>
    %123 = arith.addf %107, %122 : vector<16x128xf32>
    %124 = vector.extract_strided_slice %118 {offsets = [4, 0], sizes = [16, 128], strides = [1, 1]} : vector<24x128xbf16> to vector<16x128xbf16>
    %c1_84 = arith.constant 1 : index
    %c0_85 = arith.constant 0 : index
    %c0_86 = arith.constant 0 : index
    %125 = vector.load %arg18[%c1_84, %c0_85, %c0_86] : memref<3x128x128xbf16, #tpu.memory_space<vmem>>, vector<1x128x128xbf16>
    %126 = vector.shape_cast %125 : vector<1x128x128xbf16> to vector<128x128xbf16>
    %cst_87 = arith.constant dense<0.000000e+00> : vector<16x128xf32>
    %127 = tpu.matmul %124, %126, %cst_87 {dimension_numbers = #tpu.dot_dimension_numbers<[1], [0], [0], [1], [0, 0, 1, 1], [], []>} : vector<16x128xbf16>, vector<128x128xbf16>, vector<16x128xf32> -> vector<16x128xf32>
    %128 = arith.addf %123, %127 : vector<16x128xf32>
    %129 = vector.extract_strided_slice %118 {offsets = [8, 0], sizes = [16, 128], strides = [1, 1]} : vector<24x128xbf16> to vector<16x128xbf16>
    %c2_88 = arith.constant 2 : index
    %c0_89 = arith.constant 0 : index
    %c0_90 = arith.constant 0 : index
    %130 = vector.load %arg18[%c2_88, %c0_89, %c0_90] : memref<3x128x128xbf16, #tpu.memory_space<vmem>>, vector<1x128x128xbf16>
    %131 = vector.shape_cast %130 : vector<1x128x128xbf16> to vector<128x128xbf16>
    %cst_91 = arith.constant dense<0.000000e+00> : vector<16x128xf32>
    %132 = tpu.matmul %129, %131, %cst_91 {dimension_numbers = #tpu.dot_dimension_numbers<[1], [0], [0], [1], [0, 0, 1, 1], [], []>} : vector<16x128xbf16>, vector<128x128xbf16>, vector<16x128xf32> -> vector<16x128xf32>
    %133 = arith.addf %128, %132 : vector<16x128xf32>
    %c0_92 = arith.constant 0 : index
    %c0_93 = arith.constant 0 : index
    %c0_94 = arith.constant 0 : index
    %134 = vector.load %arg21[%c0_92, %c0_93, %c0_94] : memref<1x16x128xf32, #tpu.memory_space<vmem>>, vector<1x16x128xf32>
    %135 = vector.shape_cast %134 : vector<1x16x128xf32> to vector<16x128xf32>
    %136 = vector.shape_cast %133 : vector<16x128xf32> to vector<1x16x128xf32>
    tpu.vector_store %arg21[%c0_92, %c0_93, %c0_94], %136 {strides = array<i32>} : memref<1x16x128xf32, #tpu.memory_space<vmem>>, vector<1x16x128xf32>,
    return
  }
  func.func @transform_0(%arg0: i32) -> (i32, i32, i32) {
    %c0_i32 = arith.constant 0 : i32
    %c0_i32_0 = arith.constant 0 : i32
    %c0_i32_1 = arith.constant 0 : i32
    return %arg0, %c0_i32, %c0_i32_0 : i32, i32, i32
  }
  func.func @transform_1(%arg0: i32) -> (i32, i32) {
    %c0_i32 = arith.constant 0 : i32
    %c0_i32_0 = arith.constant 0 : i32
    %c0_i32_1 = arith.constant 0 : i32
    return %c0_i32, %c0_i32_0 : i32, i32
  }
  func.func @transform_2(%arg0: i32) -> (i32, i32) {
    %c0_i32 = arith.constant 0 : i32
    %c0_i32_0 = arith.constant 0 : i32
    %c0_i32_1 = arith.constant 0 : i32
    return %c0_i32, %c0_i32_0 : i32, i32
  }
  func.func @transform_3(%arg0: i32) -> (i32, i32) {
    %c0_i32 = arith.constant 0 : i32
    %c0_i32_0 = arith.constant 0 : i32
    %c0_i32_1 = arith.constant 0 : i32
    return %c0_i32, %c0_i32_0 : i32, i32
  }
  func.func @transform_4(%arg0: i32) -> (i32, i32) {
    %c0_i32 = arith.constant 0 : i32
    %c0_i32_0 = arith.constant 0 : i32
    %c0_i32_1 = arith.constant 0 : i32
    return %c0_i32, %c0_i32_0 : i32, i32
  }
  func.func @transform_5(%arg0: i32) -> (i32, i32, i32) {
    %c0_i32 = arith.constant 0 : i32
    %c0_i32_0 = arith.constant 0 : i32
    %c0_i32_1 = arith.constant 0 : i32
    %c0_i32_2 = arith.constant 0 : i32
    return %c0_i32, %c0_i32_0, %c0_i32_1 : i32, i32, i32
  }
  func.func @transform_6(%arg0: i32) -> (i32, i32) {
    %c0_i32 = arith.constant 0 : i32
    %c0_i32_0 = arith.constant 0 : i32
    %c0_i32_1 = arith.constant 0 : i32
    return %c0_i32, %c0_i32_0 : i32, i32
  }
  func.func @transform_7(%arg0: i32) -> (i32, i32) {
    %c0_i32 = arith.constant 0 : i32
    %c0_i32_0 = arith.constant 0 : i32
    %c0_i32_1 = arith.constant 0 : i32
    return %c0_i32, %c0_i32_0 : i32, i32
  }
  func.func @transform_8(%arg0: i32) -> (i32, i32) {
    %c0_i32 = arith.constant 0 : i32
    %c0_i32_0 = arith.constant 0 : i32
    %c0_i32_1 = arith.constant 0 : i32
    return %c0_i32, %c0_i32_0 : i32, i32
  }
  func.func @transform_9(%arg0: i32) -> (i32, i32) {
    %c0_i32 = arith.constant 0 : i32
    %c0_i32_0 = arith.constant 0 : i32
    %c0_i32_1 = arith.constant 0 : i32
    return %c0_i32, %c0_i32_0 : i32, i32
  }
  func.func @transform_10(%arg0: i32) -> (i32, i32) {
    %c0_i32 = arith.constant 0 : i32
    %c0_i32_0 = arith.constant 0 : i32
    %c0_i32_1 = arith.constant 0 : i32
    return %c0_i32, %c0_i32_0 : i32, i32
  }
  func.func @transform_11(%arg0: i32) -> (i32, i32) {
    %c0_i32 = arith.constant 0 : i32
    %c0_i32_0 = arith.constant 0 : i32
    %c0_i32_1 = arith.constant 0 : i32
    return %c0_i32, %c0_i32_0 : i32, i32
  }
  func.func @transform_12(%arg0: i32) -> (i32, i32, i32) {
    %c0_i32 = arith.constant 0 : i32
    %c0_i32_0 = arith.constant 0 : i32
    %c0_i32_1 = arith.constant 0 : i32
    %c0_i32_2 = arith.constant 0 : i32
    return %c0_i32, %c0_i32_0, %c0_i32_1 : i32, i32, i32
  }
  func.func @transform_13(%arg0: i32) -> (i32, i32) {
    %c0_i32 = arith.constant 0 : i32
    %c0_i32_0 = arith.constant 0 : i32
    %c0_i32_1 = arith.constant 0 : i32
    return %c0_i32, %c0_i32_0 : i32, i32
  }
  func.func @transform_14(%arg0: i32) -> (i32, i32) {
    %c0_i32 = arith.constant 0 : i32
    %c0_i32_0 = arith.constant 0 : i32
    %c0_i32_1 = arith.constant 0 : i32
    return %c0_i32, %c0_i32_0 : i32, i32
  }
  func.func @transform_15(%arg0: i32) -> (i32, i32) {
    %c0_i32 = arith.constant 0 : i32
    %c0_i32_0 = arith.constant 0 : i32
    %c0_i32_1 = arith.constant 0 : i32
    return %c0_i32, %c0_i32_0 : i32, i32
  }
  func.func @transform_16(%arg0: i32) -> (i32, i32) {
    %c0_i32 = arith.constant 0 : i32
    %c0_i32_0 = arith.constant 0 : i32
    %c0_i32_1 = arith.constant 0 : i32
    return %c0_i32, %c0_i32_0 : i32, i32
  }
  func.func @transform_17(%arg0: i32) -> (i32, i32, i32) {
    %c0_i32 = arith.constant 0 : i32
    %c0_i32_0 = arith.constant 0 : i32
    %c0_i32_1 = arith.constant 0 : i32
    %c0_i32_2 = arith.constant 0 : i32
    return %c0_i32, %c0_i32_0, %c0_i32_1 : i32, i32, i32
  }
  func.func @transform_18(%arg0: i32) -> (i32, i32) {
    %c0_i32 = arith.constant 0 : i32
    %c0_i32_0 = arith.constant 0 : i32
    %c0_i32_1 = arith.constant 0 : i32
    return %c0_i32, %c0_i32_0 : i32, i32
  }
  func.func @transform_19(%arg0: i32) -> (i32, i32) {
    %c0_i32 = arith.constant 0 : i32
    %c0_i32_0 = arith.constant 0 : i32
    %c0_i32_1 = arith.constant 0 : i32
    return %c0_i32, %c0_i32_0 : i32, i32
  }
  func.func @transform_20(%arg0: i32) -> (i32, i32, i32) {
    %c0_i32 = arith.constant 0 : i32
    %c0_i32_0 = arith.constant 0 : i32
    %c0_i32_1 = arith.constant 0 : i32
    return %arg0, %c0_i32, %c0_i32_0 : i32, i32, i32
  }
}

</mosaic_0001>

<llo_original>
// kernel: tpu_custom_call.1
$region0: #{tpu_custom_call.1}
  #allocation0 [shape = 'u32[]', space=smem, size = 0x4, offset = 0x4, fixed_abs, tag = 'smem constant byte address 0x4 - core index']
  #allocation1 [shape = 'u32[72,128]{1,0:T(1,128)}', space=vmem, size = 0x9000, scoped, tag = 'internal scratch']
  %s0 = inlined_call_operand.hbm [shape: f32[2,16,64], index: 0, kind: input, shape index: {}]
  %s1 = inlined_call_operand.hbm [shape: f32[1,64], index: 1, kind: input, shape index: {}]
  %s2 = inlined_call_operand.vmem [shape: f32[1,64], index: 2, kind: input, shape index: {}]
  %s3 = inlined_call_operand.vmem [shape: f32[1,64], index: 3, kind: input, shape index: {}]
  %s4 = inlined_call_operand.vmem [shape: f32[1,64], index: 4, kind: input, shape index: {}]
  %s5 = inlined_call_operand.hbm [shape: bf16[5,64,128], index: 5, kind: input, shape index: {}]
  %s6 = inlined_call_operand.hbm [shape: bf16[64,128], index: 6, kind: input, shape index: {}]
  %s7 = inlined_call_operand.vmem [shape: f32[1,128], index: 7, kind: input, shape index: {}]
  %s8 = inlined_call_operand.vmem [shape: f32[1,128], index: 8, kind: input, shape index: {}]
  %s9 = inlined_call_operand.vmem [shape: f32[1,128], index: 9, kind: input, shape index: {}]
  %s10 = inlined_call_operand.vmem [shape: f32[1,128], index: 10, kind: input, shape index: {}]
  %s11 = inlined_call_operand.vmem [shape: f32[1,128], index: 11, kind: input, shape index: {}]
  %s12 = inlined_call_operand.hbm [shape: bf16[5,128,128], index: 12, kind: input, shape index: {}]
  %s13 = inlined_call_operand.hbm [shape: bf16[128,128], index: 13, kind: input, shape index: {}]
  %s14 = inlined_call_operand.vmem [shape: f32[1,128], index: 14, kind: input, shape index: {}]
  %s15 = inlined_call_operand.vmem [shape: f32[1,128], index: 15, kind: input, shape index: {}]
  %s16 = inlined_call_operand.vmem [shape: f32[1,128], index: 16, kind: input, shape index: {}]
  %s17 = inlined_call_operand.hbm [shape: bf16[3,128,128], index: 17, kind: input, shape index: {}]
  %s18 = inlined_call_operand.hbm [shape: bf16[64,128], index: 18, kind: input, shape index: {}]
  %s19 = inlined_call_operand.vmem [shape: f32[1,128], index: 19, kind: input, shape index: {}]
  %s20 = inlined_call_operand.hbm [shape: f32[2,16,128], index: 20, kind: output, shape index: {}]
  %s21 = sld [smem:[#allocation0]]
  $region145: #{tpu_custom_call.1} parent=0
    _
  %s23 = ssub.s32 1, %s21
  %s24 = scalar_select 0, %s23, %s21
  $region1: #{tpu_custom_call.1} parent=0
    #allocation2 [shape = 'u8[16384]{0}', space=vmem, size = 0x4000, scoped, tag = 'input window, operand 0']
    #allocation3 [shape = 's32[2]{0}', space=sflag, size = 0x8, scoped, tag = 'scoped memory for tpu_custom_call.1']
    #allocation4 [shape = 's32[2]{0}', space=sflag, size = 0x8, scoped, tag = 'scoped memory for tpu_custom_call.1']
    #allocation5 [shape = 'u8[512]{0}', space=vmem, size = 0x400, scoped, tag = 'input window, operand 1, single buffered']
    #allocation6 [shape = 's32[1]{0}', space=sflag, size = 0x4, scoped, tag = 'scoped memory for tpu_custom_call.1']
    #allocation7 [shape = 'u8[81920]{0}', space=vmem, size = 0x14000, scoped, tag = 'input window, operand 5, single buffered']
    #allocation8 [shape = 'u8[16384]{0}', space=vmem, size = 0x4000, scoped, tag = 'input window, operand 6, single buffered']
    #allocation9 [shape = 's32[1]{0}', space=sflag, size = 0x4, scoped, tag = 'scoped memory for tpu_custom_call.1']
    #allocation10 [shape = 'u8[163840]{0}', space=vmem, size = 0x28000, scoped, tag = 'input window, operand 12, single buffered']
    #allocation11 [shape = 'u8[32768]{0}', space=vmem, size = 0x8000, scoped, tag = 'input window, operand 13, single buffered']
    #allocation12 [shape = 's32[1]{0}', space=sflag, size = 0x4, scoped, tag = 'scoped memory for tpu_custom_call.1']
    #allocation13 [shape = 'u8[98304]{0}', space=vmem, size = 0x18000, scoped, tag = 'input window, operand 17, single buffered']
    #allocation14 [shape = 'u8[16384]{0}', space=vmem, size = 0x4000, scoped, tag = 'input window, operand 18, single buffered']
    #allocation15 [shape = 's32[1]{0}', space=sflag, size = 0x4, scoped, tag = 'scoped memory for tpu_custom_call.1']
    #allocation16 [shape = 'u8[16384]{0}', space=vmem, size = 0x4000, scoped, tag = 'output window, operand 0']
    %25 = vsyncpa [#allocation3], 0
    %s26 = scalar_lea.sflag [#allocation3], 1
    %27 = vsyncpa %s26, 0
    %28 = vsyncpa [#allocation6], 0
    %29 = vsyncpa [#allocation9], 0
    %30 = vsyncpa [#allocation12], 0
    %31 = vsyncpa [#allocation15], 0
    %32 = vsyncpa [#allocation4], 0
    %s33 = scalar_lea.sflag [#allocation4], 1
    %34 = vsyncpa %s33, 0
    loop: start=0, step=1, limit=4
    $region2: #{tpu_custom_call.1} parent=1 // loop_pre_header
      _
    $region3: #{tpu_custom_call.1} parent=1 // loop_header
      %s36 = sphi 0, %s40
      %p37 = scmp.ge.s32.totalorder %s36, 4
      %s46 = sphi 0, %s48
      %s49 = sphi 0, %s46
      %s50 = sphi 0, %s49
      %s66 = sphi 0, %s50
      %s70 = sphi 0, %s70
      %s72 = sphi 0, %s70
      %s73 = sphi 0, %s72
      %s87 = sphi 0, %s73
      %s91 = sphi 0, %s91
      %s93 = sphi 0, %s91
      %s94 = sphi 0, %s93
      %s108 = sphi 0, %s94
      %s112 = sphi 0, %s112
      %s114 = sphi 0, %s112
      %s115 = sphi 0, %s114
      %s129 = sphi 0, %s115
      %s133 = sphi 0, %s133
      %s135 = sphi 0, %s133
      %s136 = sphi 0, %s135
      %s150 = sphi 0, %s136
      %s154 = sphi 0, %s154
      %s156 = sphi 0, %s154
      %s157 = sphi 0, %s156
      %s171 = sphi 0, %s157
      %s175 = sphi 0, %s175
      %s177 = sphi 0, %s175
      %s178 = sphi 0, %s177
      %s192 = sphi 0, %s178
      %s196 = sphi 0, %s196
      %s198 = sphi 0, %s196
      %s199 = sphi 0, %s198
      %s213 = sphi 0, %s199
      %s217 = sphi 0, %s217
      %s219 = sphi 0, %s217
      %s220 = sphi 0, %s219
      %s234 = sphi 0, %s220
      %s238 = sphi 0, %s238
      %s240 = sphi 0, %s238
      %s241 = sphi 0, %s240
      %s255 = sphi 0, %s241
      %s259 = sphi 0, %s259
      %s261 = sphi 0, %s259
      %s262 = sphi 0, %s261
      %s276 = sphi 0, %s262
      %s280 = sphi 0, %s280
      %s282 = sphi 0, %s280
      %s283 = sphi 0, %s282
      %s297 = sphi 0, %s283
      %s301 = sphi 0, %s301
      %s303 = sphi 0, %s301
      %s304 = sphi 0, %s303
      %s318 = sphi 0, %s304
      %s322 = sphi 0, %s322
      %s324 = sphi 0, %s322
      %s325 = sphi 0, %s324
      %s339 = sphi 0, %s325
      %s343 = sphi 0, %s343
      %s345 = sphi 0, %s343
      %s346 = sphi 0, %s345
      %s360 = sphi 0, %s346
      %s364 = sphi 0, %s364
      %s366 = sphi 0, %s364
      %s367 = sphi 0, %s366
      %s381 = sphi 0, %s367
      %s385 = sphi 0, %s385
      %s387 = sphi 0, %s385
      %s388 = sphi 0, %s387
      %s402 = sphi 0, %s388
      %s406 = sphi 0, %s406
      %s408 = sphi 0, %s406
      %s409 = sphi 0, %s408
      %s423 = sphi 0, %s409
      %s427 = sphi 0, %s427
      %s429 = sphi 0, %s427
      %s430 = sphi 0, %s429
      %s444 = sphi 0, %s430
      %s448 = sphi 0, %s448
      %s450 = sphi 0, %s448
      %s451 = sphi 0, %s450
      %s465 = sphi 0, %s451
      %s471 = sphi 0, %s473
      %s474 = sphi 0, %s471
      %s475 = sphi 0, %s474
      %s491 = sphi 0, %s475
    $region4: #{tpu_custom_call.1} parent=1 // loop_header_branch
      %39 = sbr.rel (%p37) target = $region8
    $region5: #{tpu_custom_call.1} parent=1 // loop_body
      %s41 = ssub.s32 %s36, 1
      %s42 = ssub.s32 %s36, 2
      %s43 = sadd.s32 %s36, 1
      %s44 = ssub.s32 %s36, %s43
      %p45 = scmp.eq.s32.totalorder %s44, 0
      %s47 = sadd.s32 %s46, 1
      %s48 = scalar_select %p45, %s46, %s47
      %p51 = pneg %p45
      %p52 = scmp.eq.s32.totalorder %s36, 1
      %p53 = por %p51, %p52
      %p54 = scmp.ne.s32.totalorder %s46, %s49
      %p55 = scmp.eq.s32.totalorder %s36, 0
      %p56 = por %p54, %p55
      %p57 = scmp.ne.s32.totalorder %s46, %s49
      %p58 = scmp.eq.s32.totalorder %s41, 1
      %p59 = por %p57, %p58
      %p60 = scmp.ne.s32.totalorder %s49, %s50
      %p61 = scmp.eq.s32.totalorder %s41, 0
      %p62 = por %p60, %p61
      %p63 = scmp.ne.s32.totalorder %s49, %s50
      %p64 = scmp.eq.s32.totalorder %s42, 1
      %p65 = por %p63, %p64
      %p67 = scmp.ne.s32.totalorder %s50, %s66
      %p68 = scmp.eq.s32.totalorder %s42, 0
      %p69 = por %p67, %p68
      %s71 = sadd.s32 %s70, 1
      %p74 = scmp.eq.s32.totalorder %s36, 1
      %p75 = scmp.ne.s32.totalorder %s70, %s72
      %p76 = scmp.eq.s32.totalorder %s36, 0
      %p77 = por %p75, %p76
      %p78 = scmp.ne.s32.totalorder %s70, %s72
      %p79 = scmp.eq.s32.totalorder %s41, 1
      %p80 = por %p78, %p79
      %p81 = scmp.ne.s32.totalorder %s72, %s73
      %p82 = scmp.eq.s32.totalorder %s41, 0
      %p83 = por %p81, %p82
      %p84 = scmp.ne.s32.totalorder %s72, %s73
      %p85 = scmp.eq.s32.totalorder %s42, 1
      %p86 = por %p84, %p85
      %p88 = scmp.ne.s32.totalorder %s73, %s87
      %p89 = scmp.eq.s32.totalorder %s42, 0
      %p90 = por %p88, %p89
      %s92 = sadd.s32 %s91, 1
      %p95 = scmp.eq.s32.totalorder %s36, 1
      %p96 = scmp.ne.s32.totalorder %s91, %s93
      %p97 = scmp.eq.s32.totalorder %s36, 0
      %p98 = por %p96, %p97
      %p99 = scmp.ne.s32.totalorder %s91, %s93
      %p100 = scmp.eq.s32.totalorder %s41, 1
      %p101 = por %p99, %p100
      %p102 = scmp.ne.s32.totalorder %s93, %s94
      %p103 = scmp.eq.s32.totalorder %s41, 0
      %p104 = por %p102, %p103
      %p105 = scmp.ne.s32.totalorder %s93, %s94
      %p106 = scmp.eq.s32.totalorder %s42, 1
      %p107 = por %p105, %p106
      %p109 = scmp.ne.s32.totalorder %s94, %s108
      %p110 = scmp.eq.s32.totalorder %s42, 0
      %p111 = por %p109, %p110
      %s113 = sadd.s32 %s112, 1
      %p116 = scmp.eq.s32.totalorder %s36, 1
      %p117 = scmp.ne.s32.totalorder %s112, %s114
      %p118 = scmp.eq.s32.totalorder %s36, 0
      %p119 = por %p117, %p118
      %p120 = scmp.ne.s32.totalorder %s112, %s114
      %p121 = scmp.eq.s32.totalorder %s41, 1
      %p122 = por %p120, %p121
      %p123 = scmp.ne.s32.totalorder %s114, %s115
      %p124 = scmp.eq.s32.totalorder %s41, 0
      %p125 = por %p123, %p124
      %p126 = scmp.ne.s32.totalorder %s114, %s115
      %p127 = scmp.eq.s32.totalorder %s42, 1
      %p128 = por %p126, %p127
      %p130 = scmp.ne.s32.totalorder %s115, %s129
      %p131 = scmp.eq.s32.totalorder %s42, 0
      %p132 = por %p130, %p131
      %s134 = sadd.s32 %s133, 1
      %p137 = scmp.eq.s32.totalorder %s36, 1
      %p138 = scmp.ne.s32.totalorder %s133, %s135
      %p139 = scmp.eq.s32.totalorder %s36, 0
      %p140 = por %p138, %p139
      %p141 = scmp.ne.s32.totalorder %s133, %s135
      %p142 = scmp.eq.s32.totalorder %s41, 1
      %p143 = por %p141, %p142
      %p144 = scmp.ne.s32.totalorder %s135, %s136
      %p145 = scmp.eq.s32.totalorder %s41, 0
      %p146 = por %p144, %p145
      %p147 = scmp.ne.s32.totalorder %s135, %s136
      %p148 = scmp.eq.s32.totalorder %s42, 1
      %p149 = por %p147, %p148
      %p151 = scmp.ne.s32.totalorder %s136, %s150
      %p152 = scmp.eq.s32.totalorder %s42, 0
      %p153 = por %p151, %p152
      %s155 = sadd.s32 %s154, 1
      %p158 = scmp.eq.s32.totalorder %s36, 1
      %p159 = scmp.ne.s32.totalorder %s154, %s156
      %p160 = scmp.eq.s32.totalorder %s36, 0
      %p161 = por %p159, %p160
      %p162 = scmp.ne.s32.totalorder %s154, %s156
      %p163 = scmp.eq.s32.totalorder %s41, 1
      %p164 = por %p162, %p163
      %p165 = scmp.ne.s32.totalorder %s156, %s157
      %p166 = scmp.eq.s32.totalorder %s41, 0
      %p167 = por %p165, %p166
      %p168 = scmp.ne.s32.totalorder %s156, %s157
      %p169 = scmp.eq.s32.totalorder %s42, 1
      %p170 = por %p168, %p169
      %p172 = scmp.ne.s32.totalorder %s157, %s171
      %p173 = scmp.eq.s32.totalorder %s42, 0
      %p174 = por %p172, %p173
      %s176 = sadd.s32 %s175, 1
      %p179 = scmp.eq.s32.totalorder %s36, 1
      %p180 = scmp.ne.s32.totalorder %s175, %s177
      %p181 = scmp.eq.s32.totalorder %s36, 0
      %p182 = por %p180, %p181
      %p183 = scmp.ne.s32.totalorder %s175, %s177
      %p184 = scmp.eq.s32.totalorder %s41, 1
      %p185 = por %p183, %p184
      %p186 = scmp.ne.s32.totalorder %s177, %s178
      %p187 = scmp.eq.s32.totalorder %s41, 0
      %p188 = por %p186, %p187
      %p189 = scmp.ne.s32.totalorder %s177, %s178
      %p190 = scmp.eq.s32.totalorder %s42, 1
      %p191 = por %p189, %p190
      %p193 = scmp.ne.s32.totalorder %s178, %s192
      %p194 = scmp.eq.s32.totalorder %s42, 0
      %p195 = por %p193, %p194
      %s197 = sadd.s32 %s196, 1
      %p200 = scmp.eq.s32.totalorder %s36, 1
      %p201 = scmp.ne.s32.totalorder %s196, %s198
      %p202 = scmp.eq.s32.totalorder %s36, 0
      %p203 = por %p201, %p202
      %p204 = scmp.ne.s32.totalorder %s196, %s198
      %p205 = scmp.eq.s32.totalorder %s41, 1
      %p206 = por %p204, %p205
      %p207 = scmp.ne.s32.totalorder %s198, %s199
      %p208 = scmp.eq.s32.totalorder %s41, 0
      %p209 = por %p207, %p208
      %p210 = scmp.ne.s32.totalorder %s198, %s199
      %p211 = scmp.eq.s32.totalorder %s42, 1
      %p212 = por %p210, %p211
      %p214 = scmp.ne.s32.totalorder %s199, %s213
      %p215 = scmp.eq.s32.totalorder %s42, 0
      %p216 = por %p214, %p215
      %s218 = sadd.s32 %s217, 1
      %p221 = scmp.eq.s32.totalorder %s36, 1
      %p222 = scmp.ne.s32.totalorder %s217, %s219
      %p223 = scmp.eq.s32.totalorder %s36, 0
      %p224 = por %p222, %p223
      %p225 = scmp.ne.s32.totalorder %s217, %s219
      %p226 = scmp.eq.s32.totalorder %s41, 1
      %p227 = por %p225, %p226
      %p228 = scmp.ne.s32.totalorder %s219, %s220
      %p229 = scmp.eq.s32.totalorder %s41, 0
      %p230 = por %p228, %p229
      %p231 = scmp.ne.s32.totalorder %s219, %s220
      %p232 = scmp.eq.s32.totalorder %s42, 1
      %p233 = por %p231, %p232
      %p235 = scmp.ne.s32.totalorder %s220, %s234
      %p236 = scmp.eq.s32.totalorder %s42, 0
      %p237 = por %p235, %p236
      %s239 = sadd.s32 %s238, 1
      %p242 = scmp.eq.s32.totalorder %s36, 1
      %p243 = scmp.ne.s32.totalorder %s238, %s240
      %p244 = scmp.eq.s32.totalorder %s36, 0
      %p245 = por %p243, %p244
      %p246 = scmp.ne.s32.totalorder %s238, %s240
      %p247 = scmp.eq.s32.totalorder %s41, 1
      %p248 = por %p246, %p247
      %p249 = scmp.ne.s32.totalorder %s240, %s241
      %p250 = scmp.eq.s32.totalorder %s41, 0
      %p251 = por %p249, %p250
      %p252 = scmp.ne.s32.totalorder %s240, %s241
      %p253 = scmp.eq.s32.totalorder %s42, 1
      %p254 = por %p252, %p253
      %p256 = scmp.ne.s32.totalorder %s241, %s255
      %p257 = scmp.eq.s32.totalorder %s42, 0
      %p258 = por %p256, %p257
      %s260 = sadd.s32 %s259, 1
      %p263 = scmp.eq.s32.totalorder %s36, 1
      %p264 = scmp.ne.s32.totalorder %s259, %s261
      %p265 = scmp.eq.s32.totalorder %s36, 0
      %p266 = por %p264, %p265
      %p267 = scmp.ne.s32.totalorder %s259, %s261
      %p268 = scmp.eq.s32.totalorder %s41, 1
      %p269 = por %p267, %p268
      %p270 = scmp.ne.s32.totalorder %s261, %s262
      %p271 = scmp.eq.s32.totalorder %s41, 0
      %p272 = por %p270, %p271
      %p273 = scmp.ne.s32.totalorder %s261, %s262
      %p274 = scmp.eq.s32.totalorder %s42, 1
      %p275 = por %p273, %p274
      %p277 = scmp.ne.s32.totalorder %s262, %s276
      %p278 = scmp.eq.s32.totalorder %s42, 0
      %p279 = por %p277, %p278
      %s281 = sadd.s32 %s280, 1
      %p284 = scmp.eq.s32.totalorder %s36, 1
      %p285 = scmp.ne.s32.totalorder %s280, %s282
      %p286 = scmp.eq.s32.totalorder %s36, 0
      %p287 = por %p285, %p286
      %p288 = scmp.ne.s32.totalorder %s280, %s282
      %p289 = scmp.eq.s32.totalorder %s41, 1
      %p290 = por %p288, %p289
      %p291 = scmp.ne.s32.totalorder %s282, %s283
      %p292 = scmp.eq.s32.totalorder %s41, 0
      %p293 = por %p291, %p292
      %p294 = scmp.ne.s32.totalorder %s282, %s283
      %p295 = scmp.eq.s32.totalorder %s42, 1
      %p296 = por %p294, %p295
      %p298 = scmp.ne.s32.totalorder %s283, %s297
      %p299 = scmp.eq.s32.totalorder %s42, 0
      %p300 = por %p298, %p299
      %s302 = sadd.s32 %s301, 1
      %p305 = scmp.eq.s32.totalorder %s36, 1
      %p306 = scmp.ne.s32.totalorder %s301, %s303
      %p307 = scmp.eq.s32.totalorder %s36, 0
      %p308 = por %p306, %p307
      %p309 = scmp.ne.s32.totalorder %s301, %s303
      %p310 = scmp.eq.s32.totalorder %s41, 1
      %p311 = por %p309, %p310
      %p312 = scmp.ne.s32.totalorder %s303, %s304
      %p313 = scmp.eq.s32.totalorder %s41, 0
      %p314 = por %p312, %p313
      %p315 = scmp.ne.s32.totalorder %s303, %s304
      %p316 = scmp.eq.s32.totalorder %s42, 1
      %p317 = por %p315, %p316
      %p319 = scmp.ne.s32.totalorder %s304, %s318
      %p320 = scmp.eq.s32.totalorder %s42, 0
      %p321 = por %p319, %p320
      %s323 = sadd.s32 %s322, 1
      %p326 = scmp.eq.s32.totalorder %s36, 1
      %p327 = scmp.ne.s32.totalorder %s322, %s324
      %p328 = scmp.eq.s32.totalorder %s36, 0
      %p329 = por %p327, %p328
      %p330 = scmp.ne.s32.totalorder %s322, %s324
      %p331 = scmp.eq.s32.totalorder %s41, 1
      %p332 = por %p330, %p331
      %p333 = scmp.ne.s32.totalorder %s324, %s325
      %p334 = scmp.eq.s32.totalorder %s41, 0
      %p335 = por %p333, %p334
      %p336 = scmp.ne.s32.totalorder %s324, %s325
      %p337 = scmp.eq.s32.totalorder %s42, 1
      %p338 = por %p336, %p337
      %p340 = scmp.ne.s32.totalorder %s325, %s339
      %p341 = scmp.eq.s32.totalorder %s42, 0
      %p342 = por %p340, %p341
      %s344 = sadd.s32 %s343, 1
      %p347 = scmp.eq.s32.totalorder %s36, 1
      %p348 = scmp.ne.s32.totalorder %s343, %s345
      %p349 = scmp.eq.s32.totalorder %s36, 0
      %p350 = por %p348, %p349
      %p351 = scmp.ne.s32.totalorder %s343, %s345
      %p352 = scmp.eq.s32.totalorder %s41, 1
      %p353 = por %p351, %p352
      %p354 = scmp.ne.s32.totalorder %s345, %s346
      %p355 = scmp.eq.s32.totalorder %s41, 0
      %p356 = por %p354, %p355
      %p357 = scmp.ne.s32.totalorder %s345, %s346
      %p358 = scmp.eq.s32.totalorder %s42, 1
      %p359 = por %p357, %p358
      %p361 = scmp.ne.s32.totalorder %s346, %s360
      %p362 = scmp.eq.s32.totalorder %s42, 0
      %p363 = por %p361, %p362
      %s365 = sadd.s32 %s364, 1
      %p368 = scmp.eq.s32.totalorder %s36, 1
      %p369 = scmp.ne.s32.totalorder %s364, %s366
      %p370 = scmp.eq.s32.totalorder %s36, 0
      %p371 = por %p369, %p370
      %p372 = scmp.ne.s32.totalorder %s364, %s366
      %p373 = scmp.eq.s32.totalorder %s41, 1
      %p374 = por %p372, %p373
      %p375 = scmp.ne.s32.totalorder %s366, %s367
      %p376 = scmp.eq.s32.totalorder %s41, 0
      %p377 = por %p375, %p376
      %p378 = scmp.ne.s32.totalorder %s366, %s367
      %p379 = scmp.eq.s32.totalorder %s42, 1
      %p380 = por %p378, %p379
      %p382 = scmp.ne.s32.totalorder %s367, %s381
      %p383 = scmp.eq.s32.totalorder %s42, 0
      %p384 = por %p382, %p383
      %s386 = sadd.s32 %s385, 1
      %p389 = scmp.eq.s32.totalorder %s36, 1
      %p390 = scmp.ne.s32.totalorder %s385, %s387
      %p391 = scmp.eq.s32.totalorder %s36, 0
      %p392 = por %p390, %p391
      %p393 = scmp.ne.s32.totalorder %s385, %s387
      %p394 = scmp.eq.s32.totalorder %s41, 1
      %p395 = por %p393, %p394
      %p396 = scmp.ne.s32.totalorder %s387, %s388
      %p397 = scmp.eq.s32.totalorder %s41, 0
      %p398 = por %p396, %p397
      %p399 = scmp.ne.s32.totalorder %s387, %s388
      %p400 = scmp.eq.s32.totalorder %s42, 1
      %p401 = por %p399, %p400
      %p403 = scmp.ne.s32.totalorder %s388, %s402
      %p404 = scmp.eq.s32.totalorder %s42, 0
      %p405 = por %p403, %p404
      %s407 = sadd.s32 %s406, 1
      %p410 = scmp.eq.s32.totalorder %s36, 1
      %p411 = scmp.ne.s32.totalorder %s406, %s408
      %p412 = scmp.eq.s32.totalorder %s36, 0
      %p413 = por %p411, %p412
      %p414 = scmp.ne.s32.totalorder %s406, %s408
      %p415 = scmp.eq.s32.totalorder %s41, 1
      %p416 = por %p414, %p415
      %p417 = scmp.ne.s32.totalorder %s408, %s409
      %p418 = scmp.eq.s32.totalorder %s41, 0
      %p419 = por %p417, %p418
      %p420 = scmp.ne.s32.totalorder %s408, %s409
      %p421 = scmp.eq.s32.totalorder %s42, 1
      %p422 = por %p420, %p421
      %p424 = scmp.ne.s32.totalorder %s409, %s423
      %p425 = scmp.eq.s32.totalorder %s42, 0
      %p426 = por %p424, %p425
      %s428 = sadd.s32 %s427, 1
      %p431 = scmp.eq.s32.totalorder %s36, 1
      %p432 = scmp.ne.s32.totalorder %s427, %s429
      %p433 = scmp.eq.s32.totalorder %s36, 0
      %p434 = por %p432, %p433
      %p435 = scmp.ne.s32.totalorder %s427, %s429
      %p436 = scmp.eq.s32.totalorder %s41, 1
      %p437 = por %p435, %p436
      %p438 = scmp.ne.s32.totalorder %s429, %s430
      %p439 = scmp.eq.s32.totalorder %s41, 0
      %p440 = por %p438, %p439
      %p441 = scmp.ne.s32.totalorder %s429, %s430
      %p442 = scmp.eq.s32.totalorder %s42, 1
      %p443 = por %p441, %p442
      %p445 = scmp.ne.s32.totalorder %s430, %s444
      %p446 = scmp.eq.s32.totalorder %s42, 0
      %p447 = por %p445, %p446
      %s449 = sadd.s32 %s448, 1
      %p452 = scmp.eq.s32.totalorder %s36, 1
      %p453 = scmp.ne.s32.totalorder %s448, %s450
      %p454 = scmp.eq.s32.totalorder %s36, 0
      %p455 = por %p453, %p454
      %p456 = scmp.ne.s32.totalorder %s448, %s450
      %p457 = scmp.eq.s32.totalorder %s41, 1
      %p458 = por %p456, %p457
      %p459 = scmp.ne.s32.totalorder %s450, %s451
      %p460 = scmp.eq.s32.totalorder %s41, 0
      %p461 = por %p459, %p460
      %p462 = scmp.ne.s32.totalorder %s450, %s451
      %p463 = scmp.eq.s32.totalorder %s42, 1
      %p464 = por %p462, %p463
      %p466 = scmp.ne.s32.totalorder %s451, %s465
      %p467 = scmp.eq.s32.totalorder %s42, 0
      %p468 = por %p466, %p467
      %s469 = ssub.s32 %s36, %s43
      %p470 = scmp.eq.s32.totalorder %s469, 0
      %s472 = sadd.s32 %s471, 1
      %s473 = scalar_select %p470, %s471, %s472
      %p476 = pneg %p470
      %p477 = scmp.eq.s32.totalorder %s36, 1
      %p478 = por %p476, %p477
      %p479 = scmp.ne.s32.totalorder %s471, %s474
      %p480 = scmp.eq.s32.totalorder %s36, 0
      %p481 = por %p479, %p480
      %p482 = scmp.ne.s32.totalorder %s471, %s474
      %p483 = scmp.eq.s32.totalorder %s41, 1
      %p484 = por %p482, %p483
      %p485 = scmp.ne.s32.totalorder %s474, %s475
      %p486 = scmp.eq.s32.totalorder %s41, 0
      %p487 = por %p485, %p486
      %p488 = scmp.ne.s32.totalorder %s474, %s475
      %p489 = scmp.eq.s32.totalorder %s42, 1
      %p490 = por %p488, %p489
      %p492 = scmp.ne.s32.totalorder %s475, %s491
      %p493 = scmp.eq.s32.totalorder %s42, 0
      %p494 = por %p492, %p493
      %p495 = scmp.le.s32.totalorder 1, %s36
      %p496 = scmp.lt.s32.totalorder %s36, 3
      %p497 = pnand %p495, %p496
      %p498 = pneg %p497
      // Predicated region
      $region9: #{tpu_custom_call.1} parent=5 // pred_check
        _
      $region10: #{tpu_custom_call.1} parent=5 // pred_check_branch
        %500 = sbr.rel (%p497) target = $region12
      $region11: #{tpu_custom_call.1} parent=5 // pred_region
        %s501 = ssub.s32 %s36, 1
        // Predicated region
        $region13: #{tpu_custom_call.1} parent=11 // pred_check
          %p502 = pneg %p83
        $region14: #{tpu_custom_call.1} parent=11 // pred_check_branch
          %504 = sbr.rel (%p502) target = $region16
        $region15: #{tpu_custom_call.1} parent=11 // pred_region
          %506 = vsyncadd [#allocation6], 0
          %s508 = sshll.u32 %s1, 4
          %s509 = int_to_ptr.hbm [resolvable:$true] %s508
          %s510 = sshll.u32 [#allocation5], 4
          %s511 = int_to_ptr.vmem [resolvable:$true] %s510
          %513 = dma.hbm_to_vmem [thread:$0]  %s509, 16, %s511, [#allocation6]
        $region16: #{tpu_custom_call.1} parent=11 // pred_fallthru
          _
        // Predicated region
        $region17: #{tpu_custom_call.1} parent=11 // pred_check
          %p514 = pneg %p104
        $region18: #{tpu_custom_call.1} parent=11 // pred_check_branch
          %516 = sbr.rel (%p514) target = $region20
        $region19: #{tpu_custom_call.1} parent=11 // pred_region
          _
        $region20: #{tpu_custom_call.1} parent=11 // pred_fallthru
          _
        // Predicated region
        $region21: #{tpu_custom_call.1} parent=11 // pred_check
          %p517 = pneg %p125
        $region22: #{tpu_custom_call.1} parent=11 // pred_check_branch
          %519 = sbr.rel (%p517) target = $region24
        $region23: #{tpu_custom_call.1} parent=11 // pred_region
          _
        $region24: #{tpu_custom_call.1} parent=11 // pred_fallthru
          _
        // Predicated region
        $region25: #{tpu_custom_call.1} parent=11 // pred_check
          %p520 = pneg %p146
        $region26: #{tpu_custom_call.1} parent=11 // pred_check_branch
          %522 = sbr.rel (%p520) target = $region28
        $region27: #{tpu_custom_call.1} parent=11 // pred_region
          _
        $region28: #{tpu_custom_call.1} parent=11 // pred_fallthru
          _
        // Predicated region
        $region29: #{tpu_custom_call.1} parent=11 // pred_check
          %p523 = pneg %p167
        $region30: #{tpu_custom_call.1} parent=11 // pred_check_branch
          %525 = sbr.rel (%p523) target = $region32
        $region31: #{tpu_custom_call.1} parent=11 // pred_region
          %527 = vsyncadd [#allocation6], 0
          %s528 = sshll.u32 %s5, 4
          %s529 = int_to_ptr.hbm [resolvable:$true] %s528
          %s530 = sshll.u32 [#allocation7], 4
          %s531 = int_to_ptr.vmem [resolvable:$true] %s530
          %536 = dma.hbm_to_vmem [thread:$0]  %s529, 2560, %s531, [#allocation6], 64, 64, 4
        $region32: #{tpu_custom_call.1} parent=11 // pred_fallthru
          _
        // Predicated region
        $region33: #{tpu_custom_call.1} parent=11 // pred_check
          %p537 = pneg %p188
        $region34: #{tpu_custom_call.1} parent=11 // pred_check_branch
          %539 = sbr.rel (%p537) target = $region36
        $region35: #{tpu_custom_call.1} parent=11 // pred_region
          %541 = vsyncadd [#allocation9], 0
          %s542 = sshll.u32 %s6, 4
          %s543 = int_to_ptr.hbm [resolvable:$true] %s542
          %s544 = sshll.u32 [#allocation8], 4
          %s545 = int_to_ptr.vmem [resolvable:$true] %s544
          %550 = dma.hbm_to_vmem [thread:$0]  %s543, 512, %s545, [#allocation9], 64, 64, 4
        $region36: #{tpu_custom_call.1} parent=11 // pred_fallthru
          _
        // Predicated region
        $region37: #{tpu_custom_call.1} parent=11 // pred_check
          %p551 = pneg %p209
        $region38: #{tpu_custom_call.1} parent=11 // pred_check_branch
          %553 = sbr.rel (%p551) target = $region40
        $region39: #{tpu_custom_call.1} parent=11 // pred_region
          _
        $region40: #{tpu_custom_call.1} parent=11 // pred_fallthru
          _
        // Predicated region
        $region41: #{tpu_custom_call.1} parent=11 // pred_check
          %p554 = pneg %p230
        $region42: #{tpu_custom_call.1} parent=11 // pred_check_branch
          %556 = sbr.rel (%p554) target = $region44
        $region43: #{tpu_custom_call.1} parent=11 // pred_region
          _
        $region44: #{tpu_custom_call.1} parent=11 // pred_fallthru
          _
        // Predicated region
        $region45: #{tpu_custom_call.1} parent=11 // pred_check
          %p557 = pneg %p251
        $region46: #{tpu_custom_call.1} parent=11 // pred_check_branch
          %559 = sbr.rel (%p557) target = $region48
        $region47: #{tpu_custom_call.1} parent=11 // pred_region
          _
        $region48: #{tpu_custom_call.1} parent=11 // pred_fallthru
          _
        // Predicated region
        $region49: #{tpu_custom_call.1} parent=11 // pred_check
          %p560 = pneg %p272
        $region50: #{tpu_custom_call.1} parent=11 // pred_check_branch
          %562 = sbr.rel (%p560) target = $region52
        $region51: #{tpu_custom_call.1} parent=11 // pred_region
          _
        $region52: #{tpu_custom_call.1} parent=11 // pred_fallthru
          _
        // Predicated region
        $region53: #{tpu_custom_call.1} parent=11 // pred_check
          %p563 = pneg %p293
        $region54: #{tpu_custom_call.1} parent=11 // pred_check_branch
          %565 = sbr.rel (%p563) target = $region56
        $region55: #{tpu_custom_call.1} parent=11 // pred_region
          _
        $region56: #{tpu_custom_call.1} parent=11 // pred_fallthru
          _
        // Predicated region
        $region57: #{tpu_custom_call.1} parent=11 // pred_check
          %p566 = pneg %p314
        $region58: #{tpu_custom_call.1} parent=11 // pred_check_branch
          %568 = sbr.rel (%p566) target = $region60
        $region59: #{tpu_custom_call.1} parent=11 // pred_region
          %570 = vsyncadd [#allocation9], 0
          %s571 = sshll.u32 %s12, 4
          %s572 = int_to_ptr.hbm [resolvable:$true] %s571
          %s573 = sshll.u32 [#allocation10], 4
          %s574 = int_to_ptr.vmem [resolvable:$true] %s573
          %579 = dma.hbm_to_vmem [thread:$0]  %s572, 5120, %s574, [#allocation9], 64, 64, 4
        $region60: #{tpu_custom_call.1} parent=11 // pred_fallthru
          _
        // Predicated region
        $region61: #{tpu_custom_call.1} parent=11 // pred_check
          %p580 = pneg %p335
        $region62: #{tpu_custom_call.1} parent=11 // pred_check_branch
          %582 = sbr.rel (%p580) target = $region64
        $region63: #{tpu_custom_call.1} parent=11 // pred_region
          %584 = vsyncadd [#allocation12], 0
          %s585 = sshll.u32 %s13, 4
          %s586 = int_to_ptr.hbm [resolvable:$true] %s585
          %s587 = sshll.u32 [#allocation11], 4
          %s588 = int_to_ptr.vmem [resolvable:$true] %s587
          %593 = dma.hbm_to_vmem [thread:$0]  %s586, 1024, %s588, [#allocation12], 64, 64, 4
        $region64: #{tpu_custom_call.1} parent=11 // pred_fallthru
          _
        // Predicated region
        $region65: #{tpu_custom_call.1} parent=11 // pred_check
          %p594 = pneg %p356
        $region66: #{tpu_custom_call.1} parent=11 // pred_check_branch
          %596 = sbr.rel (%p594) target = $region68
        $region67: #{tpu_custom_call.1} parent=11 // pred_region
          _
        $region68: #{tpu_custom_call.1} parent=11 // pred_fallthru
          _
        // Predicated region
        $region69: #{tpu_custom_call.1} parent=11 // pred_check
          %p597 = pneg %p377
        $region70: #{tpu_custom_call.1} parent=11 // pred_check_branch
          %599 = sbr.rel (%p597) target = $region72
        $region71: #{tpu_custom_call.1} parent=11 // pred_region
          _
        $region72: #{tpu_custom_call.1} parent=11 // pred_fallthru
          _
        // Predicated region
        $region73: #{tpu_custom_call.1} parent=11 // pred_check
          %p600 = pneg %p398
        $region74: #{tpu_custom_call.1} parent=11 // pred_check_branch
          %602 = sbr.rel (%p600) target = $region76
        $region75: #{tpu_custom_call.1} parent=11 // pred_region
          _
        $region76: #{tpu_custom_call.1} parent=11 // pred_fallthru
          _
        // Predicated region
        $region77: #{tpu_custom_call.1} parent=11 // pred_check
          %p603 = pneg %p419
        $region78: #{tpu_custom_call.1} parent=11 // pred_check_branch
          %605 = sbr.rel (%p603) target = $region80
        $region79: #{tpu_custom_call.1} parent=11 // pred_region
          %607 = vsyncadd [#allocation12], 0
          %s608 = sshll.u32 %s17, 4
          %s609 = int_to_ptr.hbm [resolvable:$true] %s608
          %s610 = sshll.u32 [#allocation13], 4
          %s611 = int_to_ptr.vmem [resolvable:$true] %s610
          %616 = dma.hbm_to_vmem [thread:$0]  %s609, 3072, %s611, [#allocation12], 64, 64, 4
        $region80: #{tpu_custom_call.1} parent=11 // pred_fallthru
          _
        // Predicated region
        $region81: #{tpu_custom_call.1} parent=11 // pred_check
          %p617 = pneg %p440
        $region82: #{tpu_custom_call.1} parent=11 // pred_check_branch
          %619 = sbr.rel (%p617) target = $region84
        $region83: #{tpu_custom_call.1} parent=11 // pred_region
          %621 = vsyncadd [#allocation15], 0
          %s622 = sshll.u32 %s18, 4
          %s623 = int_to_ptr.hbm [resolvable:$true] %s622
          %s624 = sshll.u32 [#allocation14], 4
          %s625 = int_to_ptr.vmem [resolvable:$true] %s624
          %630 = dma.hbm_to_vmem [thread:$0]  %s623, 512, %s625, [#allocation15], 64, 64, 4
        $region84: #{tpu_custom_call.1} parent=11 // pred_fallthru
          _
        // Predicated region
        $region85: #{tpu_custom_call.1} parent=11 // pred_check
          %p631 = pneg %p461
        $region86: #{tpu_custom_call.1} parent=11 // pred_check_branch
          %633 = sbr.rel (%p631) target = $region88
        $region87: #{tpu_custom_call.1} parent=11 // pred_region
          _
        $region88: #{tpu_custom_call.1} parent=11 // pred_fallthru
          _
      $region12: #{tpu_custom_call.1} parent=5 // pred_fallthru
        _
      %p634 = scmp.lt.s32.totalorder %s36, 2
      // Predicated region
      $region89: #{tpu_custom_call.1} parent=5 // pred_check
        %p635 = pneg %p634
      $region90: #{tpu_custom_call.1} parent=5 // pred_check_branch
        %637 = sbr.rel (%p635) target = $region92
      $region91: #{tpu_custom_call.1} parent=5 // pred_region
        // Predicated region
        $region93: #{tpu_custom_call.1} parent=91 // pred_check
          %p638 = pneg %p56
        $region94: #{tpu_custom_call.1} parent=91 // pred_check_branch
          %640 = sbr.rel (%p638) target = $region96
        $region95: #{tpu_custom_call.1} parent=91 // pred_region
          %s641 = sand.u32 %s46, 1
          %s642 = scalar_lea.sflag [#allocation3], %s641
          %s643 = sand.u32 %s46, 1
          %s644 = smul.addr %s643, 16
          %s645 = scalar_lea.vmem [#allocation2], %s644
          %647 = vsyncadd %s642, 0
          %s648 = smul.addr %s36, 2
          %s649 = smul.addr %s648, 8
          %s650 = scalar_lea.hbm %s0, %s649
          %s651 = sshll.u32 %s650, 4
          %s652 = int_to_ptr.hbm [resolvable:$true] %s651
          %s653 = sshll.u32 %s645, 4
          %s654 = int_to_ptr.vmem [resolvable:$true] %s653
          %659 = dma.hbm_to_vmem [thread:$0]  %s652, 256, %s654, %s642, 128, 128, 8
        $region96: #{tpu_custom_call.1} parent=91 // pred_fallthru
          _
      $region92: #{tpu_custom_call.1} parent=5 // pred_fallthru
        _
      %p660 = scmp.le.s32.totalorder 1, %s36
      %p661 = scmp.lt.s32.totalorder %s36, 3
      %p662 = pnand %p660, %p661
      %p663 = pneg %p662
      // Predicated region
      $region97: #{tpu_custom_call.1} parent=5 // pred_check
        _
      $region98: #{tpu_custom_call.1} parent=5 // pred_check_branch
        %665 = sbr.rel (%p662) target = $region100
      $region99: #{tpu_custom_call.1} parent=5 // pred_region
        %s666 = ssub.s32 %s36, 1
        %s667 = sand.u32 %s49, 1
        %s668 = scalar_lea.sflag [#allocation3], %s667
        %s669 = sand.u32 %s49, 1
        %s670 = smul.addr %s669, 16
        %s671 = scalar_lea.vmem [#allocation2], %s670
        // Predicated region
        $region101: #{tpu_custom_call.1} parent=99 // pred_check
          %p672 = pneg %p62
        $region102: #{tpu_custom_call.1} parent=99 // pred_check_branch
          %674 = sbr.rel (%p672) target = $region104
        $region103: #{tpu_custom_call.1} parent=99 // pred_region
          %676 = dma.done %s668, 256
        $region104: #{tpu_custom_call.1} parent=99 // pred_fallthru
          _
        // Predicated region
        $region105: #{tpu_custom_call.1} parent=99 // pred_check
          %p677 = pneg %p83
        $region106: #{tpu_custom_call.1} parent=99 // pred_check_branch
          %679 = sbr.rel (%p677) target = $region108
        $region107: #{tpu_custom_call.1} parent=99 // pred_region
          %681 = dma.done [#allocation6], 16
        $region108: #{tpu_custom_call.1} parent=99 // pred_fallthru
          _
        // Predicated region
        $region109: #{tpu_custom_call.1} parent=99 // pred_check
          %p682 = pneg %p167
        $region110: #{tpu_custom_call.1} parent=99 // pred_check_branch
          %684 = sbr.rel (%p682) target = $region112
        $region111: #{tpu_custom_call.1} parent=99 // pred_region
          %686 = dma.done [#allocation6], 2560
        $region112: #{tpu_custom_call.1} parent=99 // pred_fallthru
          _
        // Predicated region
        $region113: #{tpu_custom_call.1} parent=99 // pred_check
          %p687 = pneg %p188
        $region114: #{tpu_custom_call.1} parent=99 // pred_check_branch
          %689 = sbr.rel (%p687) target = $region116
        $region115: #{tpu_custom_call.1} parent=99 // pred_region
          %691 = dma.done [#allocation9], 512
        $region116: #{tpu_custom_call.1} parent=99 // pred_fallthru
          _
        // Predicated region
        $region117: #{tpu_custom_call.1} parent=99 // pred_check
          %p692 = pneg %p314
        $region118: #{tpu_custom_call.1} parent=99 // pred_check_branch
          %694 = sbr.rel (%p692) target = $region120
        $region119: #{tpu_custom_call.1} parent=99 // pred_region
          %696 = dma.done [#allocation9], 5120
        $region120: #{tpu_custom_call.1} parent=99 // pred_fallthru
          _
        // Predicated region
        $region121: #{tpu_custom_call.1} parent=99 // pred_check
          %p697 = pneg %p335
        $region122: #{tpu_custom_call.1} parent=99 // pred_check_branch
          %699 = sbr.rel (%p697) target = $region124
        $region123: #{tpu_custom_call.1} parent=99 // pred_region
          %701 = dma.done [#allocation12], 1024
        $region124: #{tpu_custom_call.1} parent=99 // pred_fallthru
          _
        // Predicated region
        $region125: #{tpu_custom_call.1} parent=99 // pred_check
          %p702 = pneg %p419
        $region126: #{tpu_custom_call.1} parent=99 // pred_check_branch
          %704 = sbr.rel (%p702) target = $region128
        $region127: #{tpu_custom_call.1} parent=99 // pred_region
          %706 = dma.done [#allocation12], 3072
        $region128: #{tpu_custom_call.1} parent=99 // pred_fallthru
          _
        // Predicated region
        $region129: #{tpu_custom_call.1} parent=99 // pred_check
          %p707 = pneg %p440
        $region130: #{tpu_custom_call.1} parent=99 // pred_check_branch
          %709 = sbr.rel (%p707) target = $region132
        $region131: #{tpu_custom_call.1} parent=99 // pred_region
          %711 = dma.done [#allocation15], 512
        $region132: #{tpu_custom_call.1} parent=99 // pred_fallthru
          _
        %s712 = sand.u32 %s49, 1
        %s713 = scalar_lea.sflag [#allocation3], %s712
        %s714 = sand.u32 %s49, 1
        %s715 = smul.addr %s714, 16
        %s716 = scalar_lea.vmem [#allocation2], %s715
        %p717 = pneg %p62
        %p718 = pneg %p59
        %p719 = pneg %p83
        %p720 = pneg %p80
        %p721 = pneg %p104
        %p722 = pneg %p101
        %p723 = pneg %p125
        %p724 = pneg %p122
        %p725 = pneg %p146
        %p726 = pneg %p143
        %p727 = pneg %p167
        %p728 = pneg %p164
        %p729 = pneg %p188
        %p730 = pneg %p185
        %p731 = pneg %p209
        %p732 = pneg %p206
        %p733 = pneg %p230
        %p734 = pneg %p227
        %p735 = pneg %p251
        %p736 = pneg %p248
        %p737 = pneg %p272
        %p738 = pneg %p269
        %p739 = pneg %p293
        %p740 = pneg %p290
        %p741 = pneg %p314
        %p742 = pneg %p311
        %p743 = pneg %p335
        %p744 = pneg %p332
        %p745 = pneg %p356
        %p746 = pneg %p353
        %p747 = pneg %p377
        %p748 = pneg %p374
        %p749 = pneg %p398
        %p750 = pneg %p395
        %p751 = pneg %p419
        %p752 = pneg %p416
        %p753 = pneg %p440
        %p754 = pneg %p437
        %p755 = pneg %p461
        %p756 = pneg %p458
        %p757 = pneg %p487
        %p758 = pneg %p484
        %s759 = sand.u32 %s474, 1
        %s760 = scalar_lea.sflag [#allocation4], %s759
        %s761 = sand.u32 %s474, 1
        %s762 = smul.addr %s761, 16
        %s763 = scalar_lea.vmem [#allocation16], %s762
        %v765 = vld [vmem:[%s671] sm:$0xff]
        %v766 = vld [vmem:[%s671 + $0x8] sm:$0xff]
        %v767 = vld [vmem:[#allocation5] sm:$0x1]
        %v769 = vperm.slane %v767, 0
        %v771 = vmul.f32 %v765, %v769
        %v772 = vmul.f32 %v766, %v769
        %v773 = vld [vmem:[%s2] sm:$0x1]
        %v775 = vperm.slane %v773, 0
        %v777 = vadd.f32 %v771, %v775
        %v778 = vadd.f32 %v772, %v775
        %v779 = vmax.f32 %v777, 0.0
        %v780 = vmax.f32 %v778, 0.0
        %v781 = vpack.c.bf16 %v779, %v779
        %v782 = vpack.c.bf16 %v780, %v780
        %v783 = vld [vmem:[%s3] sm:$0x1]
        %v785 = vperm.slane %v783, 0
        %v787 = vmul.f32 %v765, %v785
        %v788 = vmul.f32 %v766, %v785
        %v789 = vld [vmem:[%s4] sm:$0x1]
        %v791 = vperm.slane %v789, 0
        %v793 = vadd.f32 %v787, %v791
        %v794 = vadd.f32 %v788, %v791
        %v795 = vmax.f32 %v793, 0.0
        %v796 = vmax.f32 %v794, 0.0
        %v797 = vpack.c.bf16 %v796, %v795
        %v798 = vld [vmem:[%s7] sm:$0x1]
        %v799 = vld [vmem:[#allocation8] sm:$0xf]
        %v800 = vld [vmem:[#allocation8 + $0x4] sm:$0xf]
        %v801 = vld [vmem:[#allocation8 + $0x8] sm:$0xf]
        %v802 = vld [vmem:[#allocation8 + $0xc] sm:$0xf]
        %v803 = vld [vmem:[#allocation8 + $0x10] sm:$0xf]
        %v804 = vld [vmem:[#allocation8 + $0x14] sm:$0xf]
        %v805 = vld [vmem:[#allocation8 + $0x18] sm:$0xf]
        %v806 = vld [vmem:[#allocation8 + $0x1c] sm:$0xf]
        %v815 = vunpack.c.l.b16 %v799
        %v816 = vunpack.c.l.b16 %v800
        %v817 = vunpack.c.l.b16 %v801
        %v818 = vunpack.c.l.b16 %v802
        %v819 = vunpack.c.l.b16 %v803
        %v820 = vunpack.c.l.b16 %v804
        %v821 = vunpack.c.l.b16 %v805
        %v822 = vunpack.c.l.b16 %v806
        %v823 = vpack.c.b16 %v816, %v815
        %v824 = vpack.c.b16 %v818, %v817
        %v825 = vpack.c.b16 %v820, %v819
        %v826 = vpack.c.b16 %v822, %v821
        %vm831 = vcmask 523264
        %v833 = vsel %vm831, %v797, 0
        %835 = vmatpush.bf16.msra.mxu0 0
        %836 = vmatpush.bf16.msra.mxu0 0
        %837 = vmatpush.bf16.msra.mxu0 0
        %838 = vmatpush.bf16.msra.mxu0 0
        %839 = vmatpush.bf16.msra.mxu0 %v826
        %840 = vmatpush.bf16.msra.mxu0 %v825
        %841 = vmatpush.bf16.msra.mxu0 %v824
        %842 = vmatpush.bf16.msra.mxu0 %v823
        %843 = vmatmul.bf16.gmra.mxu0 %v833
        %v844 = vpop.f32.mrf.mxu0
        %v845 = vadd.f32 0.0, %v844
        %v846 = vpop.f32.mrf.mxu0
        %v847 = vadd.f32 0.0, %v846
        %848 = vdwg.mxu0
        %v850 = vperm.slane %v798, 0
        %v852 = vadd.f32 %v850, %v845
        %v853 = vadd.f32 %v850, %v847
        %v856 = vunpack.c.l.b16 %v781
        %v857 = vunpack.c.l.b16 %v782
        %v858 = vpack.c.b16 %v857, %v856
        %v859 = vrot.slane %v858, 6
        %vm860 = vcmask 1041408
        %v863 = vsel %vm860, 0, %v859
        %v864 = vsel %vm860, %v859, 0
        %v865 = vld [vmem:[#allocation7] sm:$0xf]
        %v866 = vld [vmem:[#allocation7 + $0x4] sm:$0xf]
        %v867 = vld [vmem:[#allocation7 + $0x8] sm:$0xf]
        %v868 = vld [vmem:[#allocation7 + $0xc] sm:$0xf]
        %v869 = vld [vmem:[#allocation7 + $0x10] sm:$0xf]
        %v870 = vld [vmem:[#allocation7 + $0x14] sm:$0xf]
        %v871 = vld [vmem:[#allocation7 + $0x18] sm:$0xf]
        %v872 = vld [vmem:[#allocation7 + $0x1c] sm:$0xf]
        %v881 = vunpack.c.l.b16 %v865
        %v882 = vunpack.c.l.b16 %v866
        %v883 = vunpack.c.l.b16 %v867
        %v884 = vunpack.c.l.b16 %v868
        %v885 = vunpack.c.l.b16 %v869
        %v886 = vunpack.c.l.b16 %v870
        %v887 = vunpack.c.l.b16 %v871
        %v888 = vunpack.c.l.b16 %v872
        %v889 = vpack.c.b16 %v882, %v881
        %v890 = vpack.c.b16 %v884, %v883
        %v891 = vpack.c.b16 %v886, %v885
        %v892 = vpack.c.b16 %v888, %v887
        %v897 = vsel %vm831, %v863, 0
        %899 = vmatpush.bf16.msra.mxu0 0
        %900 = vmatpush.bf16.msra.mxu0 0
        %901 = vmatpush.bf16.msra.mxu0 0
        %902 = vmatpush.bf16.msra.mxu0 0
        %903 = vmatpush.bf16.msra.mxu0 %v892
        %904 = vmatpush.bf16.msra.mxu0 %v891
        %905 = vmatpush.bf16.msra.mxu0 %v890
        %906 = vmatpush.bf16.msra.mxu0 %v889
        %907 = vmatmul.bf16.gmra.mxu0 %v897
        %v908 = vpop.f32.mrf.mxu0
        %v909 = vadd.f32 0.0, %v908
        %v910 = vpop.f32.mrf.mxu0
        %v911 = vadd.f32 0.0, %v910
        %912 = vdwg.mxu0
        %v913 = vadd.f32 %v852, %v909
        %v914 = vadd.f32 %v853, %v911
        %s915 = scalar_lea.vmem [#allocation7], 32
        %v916 = vld [vmem:[%s915] sm:$0xf]
        %v917 = vld [vmem:[%s915 + $0x4] sm:$0xf]
        %v918 = vld [vmem:[%s915 + $0x8] sm:$0xf]
        %v919 = vld [vmem:[%s915 + $0xc] sm:$0xf]
        %v920 = vld [vmem:[%s915 + $0x10] sm:$0xf]
        %v921 = vld [vmem:[%s915 + $0x14] sm:$0xf]
        %v922 = vld [vmem:[%s915 + $0x18] sm:$0xf]
        %v923 = vld [vmem:[%s915 + $0x1c] sm:$0xf]
        %vm926 = vcmask 1046528
        %v927 = vrot.slane %v863, 1
        %v928 = vrot.slane %v864, 1
        %v929 = vsel %vm926, %v927, %v928
        %v938 = vunpack.c.l.b16 %v916
        %v939 = vunpack.c.l.b16 %v917
        %v940 = vunpack.c.l.b16 %v918
        %v941 = vunpack.c.l.b16 %v919
        %v942 = vunpack.c.l.b16 %v920
        %v943 = vunpack.c.l.b16 %v921
        %v944 = vunpack.c.l.b16 %v922
        %v945 = vunpack.c.l.b16 %v923
        %v946 = vpack.c.b16 %v939, %v938
        %v947 = vpack.c.b16 %v941, %v940
        %v948 = vpack.c.b16 %v943, %v942
        %v949 = vpack.c.b16 %v945, %v944
        %v955 = vsel %vm831, %v929, 0
        %957 = vmatpush.bf16.msra.mxu0 0
        %958 = vmatpush.bf16.msra.mxu0 0
        %959 = vmatpush.bf16.msra.mxu0 0
        %960 = vmatpush.bf16.msra.mxu0 0
        %961 = vmatpush.bf16.msra.mxu0 %v949
        %962 = vmatpush.bf16.msra.mxu0 %v948
        %963 = vmatpush.bf16.msra.mxu0 %v947
        %964 = vmatpush.bf16.msra.mxu0 %v946
        %965 = vmatmul.bf16.gmra.mxu0 %v955
        %v966 = vpop.f32.mrf.mxu0
        %v967 = vadd.f32 0.0, %v966
        %v968 = vpop.f32.mrf.mxu0
        %v969 = vadd.f32 0.0, %v968
        %970 = vdwg.mxu0
        %v971 = vadd.f32 %v913, %v967
        %v972 = vadd.f32 %v914, %v969
        %s973 = scalar_lea.vmem [#allocation7], 64
        %v974 = vld [vmem:[%s973] sm:$0xf]
        %v975 = vld [vmem:[%s973 + $0x4] sm:$0xf]
        %v976 = vld [vmem:[%s973 + $0x8] sm:$0xf]
        %v977 = vld [vmem:[%s973 + $0xc] sm:$0xf]
        %v978 = vld [vmem:[%s973 + $0x10] sm:$0xf]
        %v979 = vld [vmem:[%s973 + $0x14] sm:$0xf]
        %v980 = vld [vmem:[%s973 + $0x18] sm:$0xf]
        %v981 = vld [vmem:[%s973 + $0x1c] sm:$0xf]
        %vm982 = vcmask 1045504
        %v983 = vrot.slane %v863, 2
        %v984 = vrot.slane %v864, 2
        %v985 = vsel %vm982, %v983, %v984
        %v994 = vunpack.c.l.b16 %v974
        %v995 = vunpack.c.l.b16 %v975
        %v996 = vunpack.c.l.b16 %v976
        %v997 = vunpack.c.l.b16 %v977
        %v998 = vunpack.c.l.b16 %v978
        %v999 = vunpack.c.l.b16 %v979
        %v1000 = vunpack.c.l.b16 %v980
        %v1001 = vunpack.c.l.b16 %v981
        %v1002 = vpack.c.b16 %v995, %v994
        %v1003 = vpack.c.b16 %v997, %v996
        %v1004 = vpack.c.b16 %v999, %v998
        %v1005 = vpack.c.b16 %v1001, %v1000
        %v1011 = vsel %vm831, %v985, 0
        %1013 = vmatpush.bf16.msra.mxu0 0
        %1014 = vmatpush.bf16.msra.mxu0 0
        %1015 = vmatpush.bf16.msra.mxu0 0
        %1016 = vmatpush.bf16.msra.mxu0 0
        %1017 = vmatpush.bf16.msra.mxu0 %v1005
        %1018 = vmatpush.bf16.msra.mxu0 %v1004
        %1019 = vmatpush.bf16.msra.mxu0 %v1003
        %1020 = vmatpush.bf16.msra.mxu0 %v1002
        %1021 = vmatmul.bf16.gmra.mxu0 %v1011
        %v1022 = vpop.f32.mrf.mxu0
        %v1023 = vadd.f32 0.0, %v1022
        %v1024 = vpop.f32.mrf.mxu0
        %v1025 = vadd.f32 0.0, %v1024
        %1026 = vdwg.mxu0
        %v1027 = vadd.f32 %v971, %v1023
        %v1028 = vadd.f32 %v972, %v1025
        %s1029 = scalar_lea.vmem [#allocation7], 96
        %v1030 = vld [vmem:[%s1029] sm:$0xf]
        %v1031 = vld [vmem:[%s1029 + $0x4] sm:$0xf]
        %v1032 = vld [vmem:[%s1029 + $0x8] sm:$0xf]
        %v1033 = vld [vmem:[%s1029 + $0xc] sm:$0xf]
        %v1034 = vld [vmem:[%s1029 + $0x10] sm:$0xf]
        %v1035 = vld [vmem:[%s1029 + $0x14] sm:$0xf]
        %v1036 = vld [vmem:[%s1029 + $0x18] sm:$0xf]
        %v1037 = vld [vmem:[%s1029 + $0x1c] sm:$0xf]
        %vm1038 = vcmask 1044480
        %v1039 = vrot.slane %v863, 3
        %v1040 = vrot.slane %v864, 3
        %v1041 = vsel %vm1038, %v1039, %v1040
        %v1050 = vunpack.c.l.b16 %v1030
        %v1051 = vunpack.c.l.b16 %v1031
        %v1052 = vunpack.c.l.b16 %v1032
        %v1053 = vunpack.c.l.b16 %v1033
        %v1054 = vunpack.c.l.b16 %v1034
        %v1055 = vunpack.c.l.b16 %v1035
        %v1056 = vunpack.c.l.b16 %v1036
        %v1057 = vunpack.c.l.b16 %v1037
        %v1058 = vpack.c.b16 %v1051, %v1050
        %v1059 = vpack.c.b16 %v1053, %v1052
        %v1060 = vpack.c.b16 %v1055, %v1054
        %v1061 = vpack.c.b16 %v1057, %v1056
        %v1067 = vsel %vm831, %v1041, 0
        %1069 = vmatpush.bf16.msra.mxu0 0
        %1070 = vmatpush.bf16.msra.mxu0 0
        %1071 = vmatpush.bf16.msra.mxu0 0
        %1072 = vmatpush.bf16.msra.mxu0 0
        %1073 = vmatpush.bf16.msra.mxu0 %v1061
        %1074 = vmatpush.bf16.msra.mxu0 %v1060
        %1075 = vmatpush.bf16.msra.mxu0 %v1059
        %1076 = vmatpush.bf16.msra.mxu0 %v1058
        %1077 = vmatmul.bf16.gmra.mxu0 %v1067
        %v1078 = vpop.f32.mrf.mxu0
        %v1079 = vadd.f32 0.0, %v1078
        %v1080 = vpop.f32.mrf.mxu0
        %v1081 = vadd.f32 0.0, %v1080
        %1082 = vdwg.mxu0
        %v1083 = vadd.f32 %v1027, %v1079
        %v1084 = vadd.f32 %v1028, %v1081
        %s1085 = scalar_lea.vmem [#allocation7], 128
        %v1086 = vld [vmem:[%s1085] sm:$0xf]
        %v1087 = vld [vmem:[%s1085 + $0x4] sm:$0xf]
        %v1088 = vld [vmem:[%s1085 + $0x8] sm:$0xf]
        %v1089 = vld [vmem:[%s1085 + $0xc] sm:$0xf]
        %v1090 = vld [vmem:[%s1085 + $0x10] sm:$0xf]
        %v1091 = vld [vmem:[%s1085 + $0x14] sm:$0xf]
        %v1092 = vld [vmem:[%s1085 + $0x18] sm:$0xf]
        %v1093 = vld [vmem:[%s1085 + $0x1c] sm:$0xf]
        %vm1094 = vcmask 1043456
        %v1095 = vrot.slane %v863, 4
        %v1096 = vrot.slane %v864, 4
        %v1097 = vsel %vm1094, %v1095, %v1096
        %v1106 = vunpack.c.l.b16 %v1086
        %v1107 = vunpack.c.l.b16 %v1087
        %v1108 = vunpack.c.l.b16 %v1088
        %v1109 = vunpack.c.l.b16 %v1089
        %v1110 = vunpack.c.l.b16 %v1090
        %v1111 = vunpack.c.l.b16 %v1091
        %v1112 = vunpack.c.l.b16 %v1092
        %v1113 = vunpack.c.l.b16 %v1093
        %v1114 = vpack.c.b16 %v1107, %v1106
        %v1115 = vpack.c.b16 %v1109, %v1108
        %v1116 = vpack.c.b16 %v1111, %v1110
        %v1117 = vpack.c.b16 %v1113, %v1112
        %v1123 = vsel %vm831, %v1097, 0
        %1125 = vmatpush.bf16.msra.mxu0 0
        %1126 = vmatpush.bf16.msra.mxu0 0
        %1127 = vmatpush.bf16.msra.mxu0 0
        %1128 = vmatpush.bf16.msra.mxu0 0
        %1129 = vmatpush.bf16.msra.mxu0 %v1117
        %1130 = vmatpush.bf16.msra.mxu0 %v1116
        %1131 = vmatpush.bf16.msra.mxu0 %v1115
        %1132 = vmatpush.bf16.msra.mxu0 %v1114
        %1133 = vmatmul.bf16.gmra.mxu0 %v1123
        %v1134 = vpop.f32.mrf.mxu0
        %v1135 = vadd.f32 0.0, %v1134
        %v1136 = vpop.f32.mrf.mxu0
        %v1137 = vadd.f32 0.0, %v1136
        %1138 = vdwg.mxu0
        %v1139 = vadd.f32 %v1083, %v1135
        %v1140 = vadd.f32 %v1084, %v1137
        %v1141 = vld [vmem:[%s8] sm:$0x1]
        %v1143 = vperm.slane %v1141, 0
        %v1145 = vmul.f32 %v1139, %v1143
        %v1146 = vmul.f32 %v1140, %v1143
        %v1147 = vld [vmem:[%s9] sm:$0x1]
        %v1149 = vperm.slane %v1147, 0
        %v1151 = vadd.f32 %v1145, %v1149
        %v1152 = vadd.f32 %v1146, %v1149
        %v1153 = vmax.f32 %v1151, 0.0
        %v1154 = vmax.f32 %v1152, 0.0
        %v1155 = vpack.c.bf16 %v1153, %v1153
        %v1156 = vpack.c.bf16 %v1154, %v1154
        %v1157 = vld [vmem:[%s10] sm:$0x1]
        %v1159 = vperm.slane %v1157, 0
        %v1161 = vmul.f32 %v1139, %v1159
        %v1162 = vmul.f32 %v1140, %v1159
        %v1163 = vld [vmem:[%s11] sm:$0x1]
        %v1165 = vperm.slane %v1163, 0
        %v1167 = vadd.f32 %v1161, %v1165
        %v1168 = vadd.f32 %v1162, %v1165
        %v1169 = vmax.f32 %v1167, 0.0
        %v1170 = vmax.f32 %v1168, 0.0
        %v1171 = vpack.c.bf16 %v1170, %v1169
        %v1172 = vld [vmem:[%s14] sm:$0x1]
        %v1173 = vld [vmem:[#allocation11] sm:$0xf]
        %v1174 = vld [vmem:[#allocation11 + $0x4] sm:$0xf]
        %v1175 = vld [vmem:[#allocation11 + $0x8] sm:$0xf]
        %v1176 = vld [vmem:[#allocation11 + $0xc] sm:$0xf]
        %v1177 = vld [vmem:[#allocation11 + $0x10] sm:$0xf]
        %v1178 = vld [vmem:[#allocation11 + $0x14] sm:$0xf]
        %v1179 = vld [vmem:[#allocation11 + $0x18] sm:$0xf]
        %v1180 = vld [vmem:[#allocation11 + $0x1c] sm:$0xf]
        %v1181 = vld [vmem:[#allocation11 + $0x20] sm:$0xf]
        %v1182 = vld [vmem:[#allocation11 + $0x24] sm:$0xf]
        %v1183 = vld [vmem:[#allocation11 + $0x28] sm:$0xf]
        %v1184 = vld [vmem:[#allocation11 + $0x2c] sm:$0xf]
        %v1185 = vld [vmem:[#allocation11 + $0x30] sm:$0xf]
        %v1186 = vld [vmem:[#allocation11 + $0x34] sm:$0xf]
        %v1187 = vld [vmem:[#allocation11 + $0x38] sm:$0xf]
        %v1188 = vld [vmem:[#allocation11 + $0x3c] sm:$0xf]
        %v1205 = vunpack.c.l.b16 %v1173
        %v1206 = vunpack.c.l.b16 %v1174
        %v1207 = vunpack.c.l.b16 %v1175
        %v1208 = vunpack.c.l.b16 %v1176
        %v1209 = vunpack.c.l.b16 %v1177
        %v1210 = vunpack.c.l.b16 %v1178
        %v1211 = vunpack.c.l.b16 %v1179
        %v1212 = vunpack.c.l.b16 %v1180
        %v1213 = vunpack.c.l.b16 %v1181
        %v1214 = vunpack.c.l.b16 %v1182
        %v1215 = vunpack.c.l.b16 %v1183
        %v1216 = vunpack.c.l.b16 %v1184
        %v1217 = vunpack.c.l.b16 %v1185
        %v1218 = vunpack.c.l.b16 %v1186
        %v1219 = vunpack.c.l.b16 %v1187
        %v1220 = vunpack.c.l.b16 %v1188
        %v1221 = vpack.c.b16 %v1206, %v1205
        %v1222 = vpack.c.b16 %v1208, %v1207
        %v1223 = vpack.c.b16 %v1210, %v1209
        %v1224 = vpack.c.b16 %v1212, %v1211
        %v1225 = vpack.c.b16 %v1214, %v1213
        %v1226 = vpack.c.b16 %v1216, %v1215
        %v1227 = vpack.c.b16 %v1218, %v1217
        %v1228 = vpack.c.b16 %v1220, %v1219
        %1237 = vmatpush.bf16.msra.mxu0 %v1228
        %1238 = vmatpush.bf16.msra.mxu0 %v1227
        %1239 = vmatpush.bf16.msra.mxu0 %v1226
        %1240 = vmatpush.bf16.msra.mxu0 %v1225
        %1241 = vmatpush.bf16.msra.mxu0 %v1224
        %1242 = vmatpush.bf16.msra.mxu0 %v1223
        %1243 = vmatpush.bf16.msra.mxu0 %v1222
        %1244 = vmatpush.bf16.msra.mxu0 %v1221
        %1245 = vmatmul.bf16.gmra.mxu0 %v1171
        %v1246 = vpop.f32.mrf.mxu0
        %v1247 = vadd.f32 0.0, %v1246
        %v1248 = vpop.f32.mrf.mxu0
        %v1249 = vadd.f32 0.0, %v1248
        %1250 = vdwg.mxu0
        %v1252 = vperm.slane %v1172, 0
        %v1254 = vadd.f32 %v1252, %v1247
        %v1255 = vadd.f32 %v1252, %v1249
        %v1258 = vunpack.c.l.b16 %v1155
        %v1259 = vunpack.c.l.b16 %v1156
        %v1260 = vpack.c.b16 %v1258, %v1258
        %v1261 = vpack.c.b16 %v1259, %v1259
        %vm1262 = vcmask 1043456
        %v1264 = vsel %vm1262, 0, %v1260
        %v1267 = vsel %vm1262, %v1261, 0
        %v1269 = vld [vmem:[#allocation10] sm:$0xf]
        %v1270 = vld [vmem:[#allocation10 + $0x4] sm:$0xf]
        %v1271 = vld [vmem:[#allocation10 + $0x8] sm:$0xf]
        %v1272 = vld [vmem:[#allocation10 + $0xc] sm:$0xf]
        %v1273 = vld [vmem:[#allocation10 + $0x10] sm:$0xf]
        %v1274 = vld [vmem:[#allocation10 + $0x14] sm:$0xf]
        %v1275 = vld [vmem:[#allocation10 + $0x18] sm:$0xf]
        %v1276 = vld [vmem:[#allocation10 + $0x1c] sm:$0xf]
        %v1277 = vld [vmem:[#allocation10 + $0x20] sm:$0xf]
        %v1278 = vld [vmem:[#allocation10 + $0x24] sm:$0xf]
        %v1279 = vld [vmem:[#allocation10 + $0x28] sm:$0xf]
        %v1280 = vld [vmem:[#allocation10 + $0x2c] sm:$0xf]
        %v1281 = vld [vmem:[#allocation10 + $0x30] sm:$0xf]
        %v1282 = vld [vmem:[#allocation10 + $0x34] sm:$0xf]
        %v1283 = vld [vmem:[#allocation10 + $0x38] sm:$0xf]
        %v1284 = vld [vmem:[#allocation10 + $0x3c] sm:$0xf]
        %v1301 = vunpack.c.l.b16 %v1269
        %v1302 = vunpack.c.l.b16 %v1270
        %v1303 = vunpack.c.l.b16 %v1271
        %v1304 = vunpack.c.l.b16 %v1272
        %v1305 = vunpack.c.l.b16 %v1273
        %v1306 = vunpack.c.l.b16 %v1274
        %v1307 = vunpack.c.l.b16 %v1275
        %v1308 = vunpack.c.l.b16 %v1276
        %v1309 = vunpack.c.l.b16 %v1277
        %v1310 = vunpack.c.l.b16 %v1278
        %v1311 = vunpack.c.l.b16 %v1279
        %v1312 = vunpack.c.l.b16 %v1280
        %v1313 = vunpack.c.l.b16 %v1281
        %v1314 = vunpack.c.l.b16 %v1282
        %v1315 = vunpack.c.l.b16 %v1283
        %v1316 = vunpack.c.l.b16 %v1284
        %v1317 = vpack.c.b16 %v1302, %v1301
        %v1318 = vpack.c.b16 %v1304, %v1303
        %v1319 = vpack.c.b16 %v1306, %v1305
        %v1320 = vpack.c.b16 %v1308, %v1307
        %v1321 = vpack.c.b16 %v1310, %v1309
        %v1322 = vpack.c.b16 %v1312, %v1311
        %v1323 = vpack.c.b16 %v1314, %v1313
        %v1324 = vpack.c.b16 %v1316, %v1315
        %1333 = vmatpush.bf16.msra.mxu0 %v1324
        %1334 = vmatpush.bf16.msra.mxu0 %v1323
        %1335 = vmatpush.bf16.msra.mxu0 %v1322
        %1336 = vmatpush.bf16.msra.mxu0 %v1321
        %1337 = vmatpush.bf16.msra.mxu0 %v1320
        %1338 = vmatpush.bf16.msra.mxu0 %v1319
        %1339 = vmatpush.bf16.msra.mxu0 %v1318
        %1340 = vmatpush.bf16.msra.mxu0 %v1317
        %1341 = vmatmul.bf16.gmra.mxu0 %v1264
        %v1342 = vpop.f32.mrf.mxu0
        %v1343 = vadd.f32 0.0, %v1342
        %v1344 = vpop.f32.mrf.mxu0
        %v1345 = vadd.f32 0.0, %v1344
        %1346 = vdwg.mxu0
        %v1347 = vadd.f32 %v1254, %v1343
        %v1348 = vadd.f32 %v1255, %v1345
        %s1349 = scalar_lea.vmem [#allocation10], 64
        %v1350 = vld [vmem:[%s1349] sm:$0xf]
        %v1351 = vld [vmem:[%s1349 + $0x4] sm:$0xf]
        %v1352 = vld [vmem:[%s1349 + $0x8] sm:$0xf]
        %v1353 = vld [vmem:[%s1349 + $0xc] sm:$0xf]
        %v1354 = vld [vmem:[%s1349 + $0x10] sm:$0xf]
        %v1355 = vld [vmem:[%s1349 + $0x14] sm:$0xf]
        %v1356 = vld [vmem:[%s1349 + $0x18] sm:$0xf]
        %v1357 = vld [vmem:[%s1349 + $0x1c] sm:$0xf]
        %v1358 = vld [vmem:[%s1349 + $0x20] sm:$0xf]
        %v1359 = vld [vmem:[%s1349 + $0x24] sm:$0xf]
        %v1360 = vld [vmem:[%s1349 + $0x28] sm:$0xf]
        %v1361 = vld [vmem:[%s1349 + $0x2c] sm:$0xf]
        %v1362 = vld [vmem:[%s1349 + $0x30] sm:$0xf]
        %v1363 = vld [vmem:[%s1349 + $0x34] sm:$0xf]
        %v1364 = vld [vmem:[%s1349 + $0x38] sm:$0xf]
        %v1365 = vld [vmem:[%s1349 + $0x3c] sm:$0xf]
        %v1368 = vrot.slane %v1264, 2
        %v1369 = vrot.slane %v1267, 2
        %v1370 = vsel %vm982, %v1368, %v1369
        %v1388 = vunpack.c.l.b16 %v1350
        %v1389 = vunpack.c.l.b16 %v1351
        %v1390 = vunpack.c.l.b16 %v1352
        %v1391 = vunpack.c.l.b16 %v1353
        %v1392 = vunpack.c.l.b16 %v1354
        %v1393 = vunpack.c.l.b16 %v1355
        %v1394 = vunpack.c.l.b16 %v1356
        %v1395 = vunpack.c.l.b16 %v1357
        %v1396 = vunpack.c.l.b16 %v1358
        %v1397 = vunpack.c.l.b16 %v1359
        %v1398 = vunpack.c.l.b16 %v1360
        %v1399 = vunpack.c.l.b16 %v1361
        %v1400 = vunpack.c.l.b16 %v1362
        %v1401 = vunpack.c.l.b16 %v1363
        %v1402 = vunpack.c.l.b16 %v1364
        %v1403 = vunpack.c.l.b16 %v1365
        %v1404 = vpack.c.b16 %v1389, %v1388
        %v1405 = vpack.c.b16 %v1391, %v1390
        %v1406 = vpack.c.b16 %v1393, %v1392
        %v1407 = vpack.c.b16 %v1395, %v1394
        %v1408 = vpack.c.b16 %v1397, %v1396
        %v1409 = vpack.c.b16 %v1399, %v1398
        %v1410 = vpack.c.b16 %v1401, %v1400
        %v1411 = vpack.c.b16 %v1403, %v1402
        %1420 = vmatpush.bf16.msra.mxu0 %v1411
        %1421 = vmatpush.bf16.msra.mxu0 %v1410
        %1422 = vmatpush.bf16.msra.mxu0 %v1409
        %1423 = vmatpush.bf16.msra.mxu0 %v1408
        %1424 = vmatpush.bf16.msra.mxu0 %v1407
        %1425 = vmatpush.bf16.msra.mxu0 %v1406
        %1426 = vmatpush.bf16.msra.mxu0 %v1405
        %1427 = vmatpush.bf16.msra.mxu0 %v1404
        %1428 = vmatmul.bf16.gmra.mxu0 %v1370
        %v1429 = vpop.f32.mrf.mxu0
        %v1430 = vadd.f32 0.0, %v1429
        %v1431 = vpop.f32.mrf.mxu0
        %v1432 = vadd.f32 0.0, %v1431
        %1433 = vdwg.mxu0
        %v1434 = vadd.f32 %v1347, %v1430
        %v1435 = vadd.f32 %v1348, %v1432
        %s1436 = scalar_lea.vmem [#allocation10], 128
        %v1437 = vld [vmem:[%s1436] sm:$0xf]
        %v1438 = vld [vmem:[%s1436 + $0x4] sm:$0xf]
        %v1439 = vld [vmem:[%s1436 + $0x8] sm:$0xf]
        %v1440 = vld [vmem:[%s1436 + $0xc] sm:$0xf]
        %v1441 = vld [vmem:[%s1436 + $0x10] sm:$0xf]
        %v1442 = vld [vmem:[%s1436 + $0x14] sm:$0xf]
        %v1443 = vld [vmem:[%s1436 + $0x18] sm:$0xf]
        %v1444 = vld [vmem:[%s1436 + $0x1c] sm:$0xf]
        %v1445 = vld [vmem:[%s1436 + $0x20] sm:$0xf]
        %v1446 = vld [vmem:[%s1436 + $0x24] sm:$0xf]
        %v1447 = vld [vmem:[%s1436 + $0x28] sm:$0xf]
        %v1448 = vld [vmem:[%s1436 + $0x2c] sm:$0xf]
        %v1449 = vld [vmem:[%s1436 + $0x30] sm:$0xf]
        %v1450 = vld [vmem:[%s1436 + $0x34] sm:$0xf]
        %v1451 = vld [vmem:[%s1436 + $0x38] sm:$0xf]
        %v1452 = vld [vmem:[%s1436 + $0x3c] sm:$0xf]
        %v1453 = vrot.slane %v1264, 4
        %v1454 = vrot.slane %v1267, 4
        %v1455 = vsel %vm1094, %v1453, %v1454
        %v1473 = vunpack.c.l.b16 %v1437
        %v1474 = vunpack.c.l.b16 %v1438
        %v1475 = vunpack.c.l.b16 %v1439
        %v1476 = vunpack.c.l.b16 %v1440
        %v1477 = vunpack.c.l.b16 %v1441
        %v1478 = vunpack.c.l.b16 %v1442
        %v1479 = vunpack.c.l.b16 %v1443
        %v1480 = vunpack.c.l.b16 %v1444
        %v1481 = vunpack.c.l.b16 %v1445
        %v1482 = vunpack.c.l.b16 %v1446
        %v1483 = vunpack.c.l.b16 %v1447
        %v1484 = vunpack.c.l.b16 %v1448
        %v1485 = vunpack.c.l.b16 %v1449
        %v1486 = vunpack.c.l.b16 %v1450
        %v1487 = vunpack.c.l.b16 %v1451
        %v1488 = vunpack.c.l.b16 %v1452
        %v1489 = vpack.c.b16 %v1474, %v1473
        %v1490 = vpack.c.b16 %v1476, %v1475
        %v1491 = vpack.c.b16 %v1478, %v1477
        %v1492 = vpack.c.b16 %v1480, %v1479
        %v1493 = vpack.c.b16 %v1482, %v1481
        %v1494 = vpack.c.b16 %v1484, %v1483
        %v1495 = vpack.c.b16 %v1486, %v1485
        %v1496 = vpack.c.b16 %v1488, %v1487
        %1505 = vmatpush.bf16.msra.mxu0 %v1496
        %1506 = vmatpush.bf16.msra.mxu0 %v1495
        %1507 = vmatpush.bf16.msra.mxu0 %v1494
        %1508 = vmatpush.bf16.msra.mxu0 %v1493
        %1509 = vmatpush.bf16.msra.mxu0 %v1492
        %1510 = vmatpush.bf16.msra.mxu0 %v1491
        %1511 = vmatpush.bf16.msra.mxu0 %v1490
        %1512 = vmatpush.bf16.msra.mxu0 %v1489
        %1513 = vmatmul.bf16.gmra.mxu0 %v1455
        %v1514 = vpop.f32.mrf.mxu0
        %v1515 = vadd.f32 0.0, %v1514
        %v1516 = vpop.f32.mrf.mxu0
        %v1517 = vadd.f32 0.0, %v1516
        %1518 = vdwg.mxu0
        %v1519 = vadd.f32 %v1434, %v1515
        %v1520 = vadd.f32 %v1435, %v1517
        %s1521 = scalar_lea.vmem [#allocation10], 192
        %v1522 = vld [vmem:[%s1521] sm:$0xf]
        %v1523 = vld [vmem:[%s1521 + $0x4] sm:$0xf]
        %v1524 = vld [vmem:[%s1521 + $0x8] sm:$0xf]
        %v1525 = vld [vmem:[%s1521 + $0xc] sm:$0xf]
        %v1526 = vld [vmem:[%s1521 + $0x10] sm:$0xf]
        %v1527 = vld [vmem:[%s1521 + $0x14] sm:$0xf]
        %v1528 = vld [vmem:[%s1521 + $0x18] sm:$0xf]
        %v1529 = vld [vmem:[%s1521 + $0x1c] sm:$0xf]
        %v1530 = vld [vmem:[%s1521 + $0x20] sm:$0xf]
        %v1531 = vld [vmem:[%s1521 + $0x24] sm:$0xf]
        %v1532 = vld [vmem:[%s1521 + $0x28] sm:$0xf]
        %v1533 = vld [vmem:[%s1521 + $0x2c] sm:$0xf]
        %v1534 = vld [vmem:[%s1521 + $0x30] sm:$0xf]
        %v1535 = vld [vmem:[%s1521 + $0x34] sm:$0xf]
        %v1536 = vld [vmem:[%s1521 + $0x38] sm:$0xf]
        %v1537 = vld [vmem:[%s1521 + $0x3c] sm:$0xf]
        %vm1538 = vcmask 1041408
        %v1539 = vrot.slane %v1264, 6
        %v1540 = vrot.slane %v1267, 6
        %v1541 = vsel %vm1538, %v1539, %v1540
        %v1559 = vunpack.c.l.b16 %v1522
        %v1560 = vunpack.c.l.b16 %v1523
        %v1561 = vunpack.c.l.b16 %v1524
        %v1562 = vunpack.c.l.b16 %v1525
        %v1563 = vunpack.c.l.b16 %v1526
        %v1564 = vunpack.c.l.b16 %v1527
        %v1565 = vunpack.c.l.b16 %v1528
        %v1566 = vunpack.c.l.b16 %v1529
        %v1567 = vunpack.c.l.b16 %v1530
        %v1568 = vunpack.c.l.b16 %v1531
        %v1569 = vunpack.c.l.b16 %v1532
        %v1570 = vunpack.c.l.b16 %v1533
        %v1571 = vunpack.c.l.b16 %v1534
        %v1572 = vunpack.c.l.b16 %v1535
        %v1573 = vunpack.c.l.b16 %v1536
        %v1574 = vunpack.c.l.b16 %v1537
        %v1575 = vpack.c.b16 %v1560, %v1559
        %v1576 = vpack.c.b16 %v1562, %v1561
        %v1577 = vpack.c.b16 %v1564, %v1563
        %v1578 = vpack.c.b16 %v1566, %v1565
        %v1579 = vpack.c.b16 %v1568, %v1567
        %v1580 = vpack.c.b16 %v1570, %v1569
        %v1581 = vpack.c.b16 %v1572, %v1571
        %v1582 = vpack.c.b16 %v1574, %v1573
        %1591 = vmatpush.bf16.msra.mxu0 %v1582
        %1592 = vmatpush.bf16.msra.mxu0 %v1581
        %1593 = vmatpush.bf16.msra.mxu0 %v1580
        %1594 = vmatpush.bf16.msra.mxu0 %v1579
        %1595 = vmatpush.bf16.msra.mxu0 %v1578
        %1596 = vmatpush.bf16.msra.mxu0 %v1577
        %1597 = vmatpush.bf16.msra.mxu0 %v1576
        %1598 = vmatpush.bf16.msra.mxu0 %v1575
        %1599 = vmatmul.bf16.gmra.mxu0 %v1541
        %v1600 = vpop.f32.mrf.mxu0
        %v1601 = vadd.f32 0.0, %v1600
        %v1602 = vpop.f32.mrf.mxu0
        %v1603 = vadd.f32 0.0, %v1602
        %1604 = vdwg.mxu0
        %v1605 = vadd.f32 %v1519, %v1601
        %v1606 = vadd.f32 %v1520, %v1603
        %s1607 = scalar_lea.vmem [#allocation10], 256
        %v1608 = vld [vmem:[%s1607] sm:$0xf]
        %v1609 = vld [vmem:[%s1607 + $0x4] sm:$0xf]
        %v1610 = vld [vmem:[%s1607 + $0x8] sm:$0xf]
        %v1611 = vld [vmem:[%s1607 + $0xc] sm:$0xf]
        %v1612 = vld [vmem:[%s1607 + $0x10] sm:$0xf]
        %v1613 = vld [vmem:[%s1607 + $0x14] sm:$0xf]
        %v1614 = vld [vmem:[%s1607 + $0x18] sm:$0xf]
        %v1615 = vld [vmem:[%s1607 + $0x1c] sm:$0xf]
        %v1616 = vld [vmem:[%s1607 + $0x20] sm:$0xf]
        %v1617 = vld [vmem:[%s1607 + $0x24] sm:$0xf]
        %v1618 = vld [vmem:[%s1607 + $0x28] sm:$0xf]
        %v1619 = vld [vmem:[%s1607 + $0x2c] sm:$0xf]
        %v1620 = vld [vmem:[%s1607 + $0x30] sm:$0xf]
        %v1621 = vld [vmem:[%s1607 + $0x34] sm:$0xf]
        %v1622 = vld [vmem:[%s1607 + $0x38] sm:$0xf]
        %v1623 = vld [vmem:[%s1607 + $0x3c] sm:$0xf]
        %v1640 = vunpack.c.l.b16 %v1608
        %v1641 = vunpack.c.l.b16 %v1609
        %v1642 = vunpack.c.l.b16 %v1610
        %v1643 = vunpack.c.l.b16 %v1611
        %v1644 = vunpack.c.l.b16 %v1612
        %v1645 = vunpack.c.l.b16 %v1613
        %v1646 = vunpack.c.l.b16 %v1614
        %v1647 = vunpack.c.l.b16 %v1615
        %v1648 = vunpack.c.l.b16 %v1616
        %v1649 = vunpack.c.l.b16 %v1617
        %v1650 = vunpack.c.l.b16 %v1618
        %v1651 = vunpack.c.l.b16 %v1619
        %v1652 = vunpack.c.l.b16 %v1620
        %v1653 = vunpack.c.l.b16 %v1621
        %v1654 = vunpack.c.l.b16 %v1622
        %v1655 = vunpack.c.l.b16 %v1623
        %v1656 = vpack.c.b16 %v1641, %v1640
        %v1657 = vpack.c.b16 %v1643, %v1642
        %v1658 = vpack.c.b16 %v1645, %v1644
        %v1659 = vpack.c.b16 %v1647, %v1646
        %v1660 = vpack.c.b16 %v1649, %v1648
        %v1661 = vpack.c.b16 %v1651, %v1650
        %v1662 = vpack.c.b16 %v1653, %v1652
        %v1663 = vpack.c.b16 %v1655, %v1654
        %1672 = vmatpush.bf16.msra.mxu0 %v1663
        %1673 = vmatpush.bf16.msra.mxu0 %v1662
        %1674 = vmatpush.bf16.msra.mxu0 %v1661
        %1675 = vmatpush.bf16.msra.mxu0 %v1660
        %1676 = vmatpush.bf16.msra.mxu0 %v1659
        %1677 = vmatpush.bf16.msra.mxu0 %v1658
        %1678 = vmatpush.bf16.msra.mxu0 %v1657
        %1679 = vmatpush.bf16.msra.mxu0 %v1656
        %1680 = vmatmul.bf16.gmra.mxu0 %v1267
        %v1681 = vpop.f32.mrf.mxu0
        %v1682 = vadd.f32 0.0, %v1681
        %v1683 = vpop.f32.mrf.mxu0
        %v1684 = vadd.f32 0.0, %v1683
        %1685 = vdwg.mxu0
        %v1686 = vadd.f32 %v1605, %v1682
        %v1687 = vadd.f32 %v1606, %v1684
        %v1688 = vld [vmem:[%s19] sm:$0x1]
        %v1689 = vpack.c.bf16 %v766, %v765
        %v1690 = vld [vmem:[#allocation14] sm:$0xf]
        %v1691 = vld [vmem:[#allocation14 + $0x4] sm:$0xf]
        %v1692 = vld [vmem:[#allocation14 + $0x8] sm:$0xf]
        %v1693 = vld [vmem:[#allocation14 + $0xc] sm:$0xf]
        %v1694 = vld [vmem:[#allocation14 + $0x10] sm:$0xf]
        %v1695 = vld [vmem:[#allocation14 + $0x14] sm:$0xf]
        %v1696 = vld [vmem:[#allocation14 + $0x18] sm:$0xf]
        %v1697 = vld [vmem:[#allocation14 + $0x1c] sm:$0xf]
        %v1706 = vunpack.c.l.b16 %v1690
        %v1707 = vunpack.c.l.b16 %v1691
        %v1708 = vunpack.c.l.b16 %v1692
        %v1709 = vunpack.c.l.b16 %v1693
        %v1710 = vunpack.c.l.b16 %v1694
        %v1711 = vunpack.c.l.b16 %v1695
        %v1712 = vunpack.c.l.b16 %v1696
        %v1713 = vunpack.c.l.b16 %v1697
        %v1714 = vpack.c.b16 %v1707, %v1706
        %v1715 = vpack.c.b16 %v1709, %v1708
        %v1716 = vpack.c.b16 %v1711, %v1710
        %v1717 = vpack.c.b16 %v1713, %v1712
        %v1723 = vsel %vm831, %v1689, 0
        %1725 = vmatpush.bf16.msra.mxu0 0
        %1726 = vmatpush.bf16.msra.mxu0 0
        %1727 = vmatpush.bf16.msra.mxu0 0
        %1728 = vmatpush.bf16.msra.mxu0 0
        %1729 = vmatpush.bf16.msra.mxu0 %v1717
        %1730 = vmatpush.bf16.msra.mxu0 %v1716
        %1731 = vmatpush.bf16.msra.mxu0 %v1715
        %1732 = vmatpush.bf16.msra.mxu0 %v1714
        %1733 = vmatmul.bf16.gmra.mxu0 %v1723
        %v1734 = vpop.f32.mrf.mxu0
        %v1735 = vadd.f32 0.0, %v1734
        %v1736 = vpop.f32.mrf.mxu0
        %v1737 = vadd.f32 0.0, %v1736
        %1738 = vdwg.mxu0
        %v1740 = vperm.slane %v1688, 0
        %v1742 = vadd.f32 %v1740, %v1735
        %v1743 = vadd.f32 %v1740, %v1737
        %v1744 = vld [vmem:[%s15] sm:$0x1]
        %v1746 = vperm.slane %v1744, 0
        %v1748 = vmul.f32 %v1686, %v1746
        %v1749 = vmul.f32 %v1687, %v1746
        %v1750 = vld [vmem:[%s16] sm:$0x1]
        %v1752 = vperm.slane %v1750, 0
        %v1754 = vadd.f32 %v1748, %v1752
        %v1755 = vadd.f32 %v1749, %v1752
        %v1756 = vmax.f32 %v1754, 0.0
        %v1757 = vmax.f32 %v1755, 0.0
        %v1758 = vpack.c.bf16 %v1756, %v1756
        %v1759 = vpack.c.bf16 %v1757, %v1757
        %v1762 = vunpack.c.l.b16 %v1758
        %v1763 = vunpack.c.l.b16 %v1759
        %v1764 = vpack.c.b16 %v1763, %v1762
        %v1765 = vrot.slane %v1764, 6
        %v1767 = vsel %vm860, 0, %v1765
        %v1769 = vsel %vm860, %v1765, 0
        %v1770 = vld [vmem:[#allocation13] sm:$0xf]
        %v1771 = vld [vmem:[#allocation13 + $0x4] sm:$0xf]
        %v1772 = vld [vmem:[#allocation13 + $0x8] sm:$0xf]
        %v1773 = vld [vmem:[#allocation13 + $0xc] sm:$0xf]
        %v1774 = vld [vmem:[#allocation13 + $0x10] sm:$0xf]
        %v1775 = vld [vmem:[#allocation13 + $0x14] sm:$0xf]
        %v1776 = vld [vmem:[#allocation13 + $0x18] sm:$0xf]
        %v1777 = vld [vmem:[#allocation13 + $0x1c] sm:$0xf]
        %v1778 = vld [vmem:[#allocation13 + $0x20] sm:$0xf]
        %v1779 = vld [vmem:[#allocation13 + $0x24] sm:$0xf]
        %v1780 = vld [vmem:[#allocation13 + $0x28] sm:$0xf]
        %v1781 = vld [vmem:[#allocation13 + $0x2c] sm:$0xf]
        %v1782 = vld [vmem:[#allocation13 + $0x30] sm:$0xf]
        %v1783 = vld [vmem:[#allocation13 + $0x34] sm:$0xf]
        %v1784 = vld [vmem:[#allocation13 + $0x38] sm:$0xf]
        %v1785 = vld [vmem:[#allocation13 + $0x3c] sm:$0xf]
        %v1802 = vunpack.c.l.b16 %v1770
        %v1803 = vunpack.c.l.b16 %v1771
        %v1804 = vunpack.c.l.b16 %v1772
        %v1805 = vunpack.c.l.b16 %v1773
        %v1806 = vunpack.c.l.b16 %v1774
        %v1807 = vunpack.c.l.b16 %v1775
        %v1808 = vunpack.c.l.b16 %v1776
        %v1809 = vunpack.c.l.b16 %v1777
        %v1810 = vunpack.c.l.b16 %v1778
        %v1811 = vunpack.c.l.b16 %v1779
        %v1812 = vunpack.c.l.b16 %v1780
        %v1813 = vunpack.c.l.b16 %v1781
        %v1814 = vunpack.c.l.b16 %v1782
        %v1815 = vunpack.c.l.b16 %v1783
        %v1816 = vunpack.c.l.b16 %v1784
        %v1817 = vunpack.c.l.b16 %v1785
        %v1818 = vpack.c.b16 %v1803, %v1802
        %v1819 = vpack.c.b16 %v1805, %v1804
        %v1820 = vpack.c.b16 %v1807, %v1806
        %v1821 = vpack.c.b16 %v1809, %v1808
        %v1822 = vpack.c.b16 %v1811, %v1810
        %v1823 = vpack.c.b16 %v1813, %v1812
        %v1824 = vpack.c.b16 %v1815, %v1814
        %v1825 = vpack.c.b16 %v1817, %v1816
        %1834 = vmatpush.bf16.msra.mxu0 %v1825
        %1835 = vmatpush.bf16.msra.mxu0 %v1824
        %1836 = vmatpush.bf16.msra.mxu0 %v1823
        %1837 = vmatpush.bf16.msra.mxu0 %v1822
        %1838 = vmatpush.bf16.msra.mxu0 %v1821
        %1839 = vmatpush.bf16.msra.mxu0 %v1820
        %1840 = vmatpush.bf16.msra.mxu0 %v1819
        %1841 = vmatpush.bf16.msra.mxu0 %v1818
        %1842 = vmatmul.bf16.gmra.mxu0 %v1767
        %v1843 = vpop.f32.mrf.mxu0
        %v1844 = vadd.f32 0.0, %v1843
        %v1845 = vpop.f32.mrf.mxu0
        %v1846 = vadd.f32 0.0, %v1845
        %1847 = vdwg.mxu0
        %v1848 = vadd.f32 %v1742, %v1844
        %v1849 = vadd.f32 %v1743, %v1846
        %s1850 = scalar_lea.vmem [#allocation13], 64
        %v1851 = vld [vmem:[%s1850] sm:$0xf]
        %v1852 = vld [vmem:[%s1850 + $0x4] sm:$0xf]
        %v1853 = vld [vmem:[%s1850 + $0x8] sm:$0xf]
        %v1854 = vld [vmem:[%s1850 + $0xc] sm:$0xf]
        %v1855 = vld [vmem:[%s1850 + $0x10] sm:$0xf]
        %v1856 = vld [vmem:[%s1850 + $0x14] sm:$0xf]
        %v1857 = vld [vmem:[%s1850 + $0x18] sm:$0xf]
        %v1858 = vld [vmem:[%s1850 + $0x1c] sm:$0xf]
        %v1859 = vld [vmem:[%s1850 + $0x20] sm:$0xf]
        %v1860 = vld [vmem:[%s1850 + $0x24] sm:$0xf]
        %v1861 = vld [vmem:[%s1850 + $0x28] sm:$0xf]
        %v1862 = vld [vmem:[%s1850 + $0x2c] sm:$0xf]
        %v1863 = vld [vmem:[%s1850 + $0x30] sm:$0xf]
        %v1864 = vld [vmem:[%s1850 + $0x34] sm:$0xf]
        %v1865 = vld [vmem:[%s1850 + $0x38] sm:$0xf]
        %v1866 = vld [vmem:[%s1850 + $0x3c] sm:$0xf]
        %v1869 = vrot.slane %v1767, 2
        %v1870 = vrot.slane %v1769, 2
        %v1871 = vsel %vm982, %v1869, %v1870
        %v1889 = vunpack.c.l.b16 %v1851
        %v1890 = vunpack.c.l.b16 %v1852
        %v1891 = vunpack.c.l.b16 %v1853
        %v1892 = vunpack.c.l.b16 %v1854
        %v1893 = vunpack.c.l.b16 %v1855
        %v1894 = vunpack.c.l.b16 %v1856
        %v1895 = vunpack.c.l.b16 %v1857
        %v1896 = vunpack.c.l.b16 %v1858
        %v1897 = vunpack.c.l.b16 %v1859
        %v1898 = vunpack.c.l.b16 %v1860
        %v1899 = vunpack.c.l.b16 %v1861
        %v1900 = vunpack.c.l.b16 %v1862
        %v1901 = vunpack.c.l.b16 %v1863
        %v1902 = vunpack.c.l.b16 %v1864
        %v1903 = vunpack.c.l.b16 %v1865
        %v1904 = vunpack.c.l.b16 %v1866
        %v1905 = vpack.c.b16 %v1890, %v1889
        %v1906 = vpack.c.b16 %v1892, %v1891
        %v1907 = vpack.c.b16 %v1894, %v1893
        %v1908 = vpack.c.b16 %v1896, %v1895
        %v1909 = vpack.c.b16 %v1898, %v1897
        %v1910 = vpack.c.b16 %v1900, %v1899
        %v1911 = vpack.c.b16 %v1902, %v1901
        %v1912 = vpack.c.b16 %v1904, %v1903
        %1921 = vmatpush.bf16.msra.mxu0 %v1912
        %1922 = vmatpush.bf16.msra.mxu0 %v1911
        %1923 = vmatpush.bf16.msra.mxu0 %v1910
        %1924 = vmatpush.bf16.msra.mxu0 %v1909
        %1925 = vmatpush.bf16.msra.mxu0 %v1908
        %1926 = vmatpush.bf16.msra.mxu0 %v1907
        %1927 = vmatpush.bf16.msra.mxu0 %v1906
        %1928 = vmatpush.bf16.msra.mxu0 %v1905
        %1929 = vmatmul.bf16.gmra.mxu0 %v1871
        %v1930 = vpop.f32.mrf.mxu0
        %v1931 = vadd.f32 0.0, %v1930
        %v1932 = vpop.f32.mrf.mxu0
        %v1933 = vadd.f32 0.0, %v1932
        %1934 = vdwg.mxu0
        %v1935 = vadd.f32 %v1848, %v1931
        %v1936 = vadd.f32 %v1849, %v1933
        %s1937 = scalar_lea.vmem [#allocation13], 128
        %v1938 = vld [vmem:[%s1937] sm:$0xf]
        %v1939 = vld [vmem:[%s1937 + $0x4] sm:$0xf]
        %v1940 = vld [vmem:[%s1937 + $0x8] sm:$0xf]
        %v1941 = vld [vmem:[%s1937 + $0xc] sm:$0xf]
        %v1942 = vld [vmem:[%s1937 + $0x10] sm:$0xf]
        %v1943 = vld [vmem:[%s1937 + $0x14] sm:$0xf]
        %v1944 = vld [vmem:[%s1937 + $0x18] sm:$0xf]
        %v1945 = vld [vmem:[%s1937 + $0x1c] sm:$0xf]
        %v1946 = vld [vmem:[%s1937 + $0x20] sm:$0xf]
        %v1947 = vld [vmem:[%s1937 + $0x24] sm:$0xf]
        %v1948 = vld [vmem:[%s1937 + $0x28] sm:$0xf]
        %v1949 = vld [vmem:[%s1937 + $0x2c] sm:$0xf]
        %v1950 = vld [vmem:[%s1937 + $0x30] sm:$0xf]
        %v1951 = vld [vmem:[%s1937 + $0x34] sm:$0xf]
        %v1952 = vld [vmem:[%s1937 + $0x38] sm:$0xf]
        %v1953 = vld [vmem:[%s1937 + $0x3c] sm:$0xf]
        %v1954 = vrot.slane %v1767, 4
        %v1955 = vrot.slane %v1769, 4
        %v1956 = vsel %vm1094, %v1954, %v1955
        %v1974 = vunpack.c.l.b16 %v1938
        %v1975 = vunpack.c.l.b16 %v1939
        %v1976 = vunpack.c.l.b16 %v1940
        %v1977 = vunpack.c.l.b16 %v1941
        %v1978 = vunpack.c.l.b16 %v1942
        %v1979 = vunpack.c.l.b16 %v1943
        %v1980 = vunpack.c.l.b16 %v1944
        %v1981 = vunpack.c.l.b16 %v1945
        %v1982 = vunpack.c.l.b16 %v1946
        %v1983 = vunpack.c.l.b16 %v1947
        %v1984 = vunpack.c.l.b16 %v1948
        %v1985 = vunpack.c.l.b16 %v1949
        %v1986 = vunpack.c.l.b16 %v1950
        %v1987 = vunpack.c.l.b16 %v1951
        %v1988 = vunpack.c.l.b16 %v1952
        %v1989 = vunpack.c.l.b16 %v1953
        %v1990 = vpack.c.b16 %v1975, %v1974
        %v1991 = vpack.c.b16 %v1977, %v1976
        %v1992 = vpack.c.b16 %v1979, %v1978
        %v1993 = vpack.c.b16 %v1981, %v1980
        %v1994 = vpack.c.b16 %v1983, %v1982
        %v1995 = vpack.c.b16 %v1985, %v1984
        %v1996 = vpack.c.b16 %v1987, %v1986
        %v1997 = vpack.c.b16 %v1989, %v1988
        %2006 = vmatpush.bf16.msra.mxu0 %v1997
        %2007 = vmatpush.bf16.msra.mxu0 %v1996
        %2008 = vmatpush.bf16.msra.mxu0 %v1995
        %2009 = vmatpush.bf16.msra.mxu0 %v1994
        %2010 = vmatpush.bf16.msra.mxu0 %v1993
        %2011 = vmatpush.bf16.msra.mxu0 %v1992
        %2012 = vmatpush.bf16.msra.mxu0 %v1991
        %2013 = vmatpush.bf16.msra.mxu0 %v1990
        %2014 = vmatmul.bf16.gmra.mxu0 %v1956
        %v2015 = vpop.f32.mrf.mxu0
        %v2016 = vadd.f32 0.0, %v2015
        %v2017 = vpop.f32.mrf.mxu0
        %v2018 = vadd.f32 0.0, %v2017
        %2019 = vdwg.mxu0
        %v2020 = vadd.f32 %v1935, %v2016
        %v2021 = vadd.f32 %v1936, %v2018
        %2022 = vst [vmem:[%s763] sm:$0xff] %v2020
        %2023 = vst [vmem:[%s763 + $0x8] sm:$0xff] %v2021
        %s2024 = sand.u32 %s474, 1
        %s2025 = scalar_lea.sflag [#allocation4], %s2024
        %s2026 = sand.u32 %s474, 1
        %s2027 = smul.addr %s2026, 16
        %s2028 = scalar_lea.vmem [#allocation16], %s2027
        // Predicated region
        $region133: #{tpu_custom_call.1} parent=99 // pred_check
          %p2029 = pneg %p484
        $region134: #{tpu_custom_call.1} parent=99 // pred_check_branch
          %2031 = sbr.rel (%p2029) target = $region136
        $region135: #{tpu_custom_call.1} parent=99 // pred_region
          %2033 = vsyncadd %s2025, 0
          %s2034 = smul.addr %s41, 2
          %s2035 = smul.addr %s2034, 8
          %s2036 = scalar_lea.hbm %s20, %s2035
          %s2037 = sshll.u32 %s2028, 4
          %s2038 = int_to_ptr.vmem [resolvable:$true] %s2037
          %s2039 = sshll.u32 %s2036, 4
          %s2040 = int_to_ptr.hbm [resolvable:$true] %s2039
          %2045 = dma.vmem_to_hbm [thread:$0]  %s2038, 256, %s2040, %s2025, 128, 128, 8
        $region136: #{tpu_custom_call.1} parent=99 // pred_fallthru
          _
      $region100: #{tpu_custom_call.1} parent=5 // pred_fallthru
        _
      %p2046 = scmp.le.s32.totalorder 2, %s36
      // Predicated region
      $region137: #{tpu_custom_call.1} parent=5 // pred_check
        %p2047 = pneg %p2046
      $region138: #{tpu_custom_call.1} parent=5 // pred_check_branch
        %2049 = sbr.rel (%p2047) target = $region140
      $region139: #{tpu_custom_call.1} parent=5 // pred_region
        %s2050 = ssub.s32 %s36, 2
        // Predicated region
        $region141: #{tpu_custom_call.1} parent=139 // pred_check
          %p2051 = pneg %p490
        $region142: #{tpu_custom_call.1} parent=139 // pred_check_branch
          %2053 = sbr.rel (%p2051) target = $region144
        $region143: #{tpu_custom_call.1} parent=139 // pred_region
          %s2054 = sand.u32 %s475, 1
          %s2055 = scalar_lea.sflag [#allocation4], %s2054
          %s2056 = sand.u32 %s475, 1
          %s2057 = smul.addr %s2056, 16
          %s2058 = scalar_lea.vmem [#allocation16], %s2057
          %2060 = dma.done %s2055, 256
        $region144: #{tpu_custom_call.1} parent=139 // pred_fallthru
          _
      $region140: #{tpu_custom_call.1} parent=5 // pred_fallthru
        _
    $region6: #{tpu_custom_call.1} parent=1 // loop_footer
      %s40 = sadd.s32 1, %s36
    $region7: #{tpu_custom_call.1} parent=1 // loop_footer_branch
      %35 = sbr.rel target = $region3
    $region8: #{tpu_custom_call.1} parent=1 // loop_exit
      _
    %2061 = vsyncpa [#allocation3], 1
    %s2062 = scalar_lea.sflag [#allocation3], 1
    %2063 = vsyncpa %s2062, 1
    %2064 = vsyncpa [#allocation6], 1
    %2065 = vsyncpa [#allocation9], 1
    %2066 = vsyncpa [#allocation12], 1
    %2067 = vsyncpa [#allocation15], 1
    %2068 = vsyncpa [#allocation4], 1
    %s2069 = scalar_lea.sflag [#allocation4], 1
    %2070 = vsyncpa %s2069, 1

</llo_original>
